<compile_context>
chip_gen: v7x
topology: tpu7x:2x2x1
jax: 0.10.0
libtpu: 0.0.40
codegen_flags: <defaults>
</compile_context>

<pallas_src>
import jax
import jax.numpy as jnp
from jax.experimental import pallas as pl
from jax.experimental.pallas import tpu as pltpu


def cnn_crf_kernel(x_ref, lens_ref, d_ref, u_ref, w1_ref, b1_ref, w2_ref,
                   b2_ref, out_ref):
    """One grid step == Bblk batch elements.

    x_ref    : VMEM (Bblk, S, E)  bf16   embeddings (unpadded)
    lens_ref : VMEM (Bblk, 1)     int32  valid lengths
    d_ref    : VMEM (M, M)        bf16   down-shift matrix (row s gets s-1, 0 at s==0)
    u_ref    : VMEM (M, M)        bf16   up-shift matrix   (row s gets s+1, 0 at s==S-1)
    w1_ref   : VMEM (3E, H)       bf16   conv1 weights, taps stacked along K
    b1_ref   : VMEM (1, H)        f32
    w2_ref   : VMEM (3H, Tp)      bf16   conv2 weights, taps stacked along K, out padded
    b2_ref   : VMEM (1, Tp)       f32    padded columns are -1e30
    out_ref  : VMEM (Bblk, S, Tp) f32    lane-dense output
    """
    Bblk, S, E = x_ref.shape
    M = Bblk * S
    Tp = out_ref.shape[2]

    x = x_ref[...].reshape(M, E)          # bf16, flat (batch*seq, chan)
    d = d_ref[...]
    u = u_ref[...]

    # Shifted copies of x with zero padding at sequence boundaries, via MXU
    # (block-diagonal shift matrices -> no concat, no unaligned slices).
    xd = jnp.dot(d, x, preferred_element_type=jnp.float32).astype(x.dtype)
    xu = jnp.dot(u, x, preferred_element_type=jnp.float32).astype(x.dtype)

    # conv1_1 (k=3, pad=1) fused across taps: (M, 3E) @ (3E, H), then ReLU.
    h = jnp.dot(jnp.concatenate([xd, x, xu], axis=-1), w1_ref[...],
                preferred_element_type=jnp.float32)
    h = jnp.maximum(h + b1_ref[...], 0.0)
    hb = h.astype(jnp.bfloat16)

    # conv1_2 (k=3, pad=1) fused across taps: (M, 3H) @ (3H, Tp).
    hd = jnp.dot(d, hb, preferred_element_type=jnp.float32).astype(jnp.bfloat16)
    hu = jnp.dot(u, hb, preferred_element_type=jnp.float32).astype(jnp.bfloat16)
    y = jnp.dot(jnp.concatenate([hd, hb, hu], axis=-1), w2_ref[...],
                preferred_element_type=jnp.float32)
    y = y + b2_ref[...]

    # softmax over (padded) tag dim; padded columns carry -1e30 bias -> 0 prob.
    m = jnp.max(y, axis=-1, keepdims=True)
    e = jnp.exp(y - m)
    p = e * pl.reciprocal(jnp.sum(e, axis=-1, keepdims=True), approx=True)

    # TODO(synk): self.crf is an externally-injected module (crf_model arg)
    # whose semantics are not defined in the reference file; treated as identity.

    # length masking: rows s >= lens[b] are zeroed (matches the x7 copy loop).
    p3 = p.reshape(Bblk, S, Tp)
    s_idx = jax.lax.broadcasted_iota(jnp.int32, (Bblk, S, Tp), 1)
    keep = s_idx < lens_ref[...].reshape(Bblk, 1, 1)
    out_ref[...] = jnp.where(keep, p3, 0.0).astype(out_ref.dtype)


def cnn_crf_forward(ids, lens, emb_table, w1, b1, w2, b2):
    """ids: (B, S) int32 token ids; lens: (B,) int32 valid lengths.

    w1: (3, E, H), b1: (H,), w2: (3, H, T), b2: (T,)  -- (tap, in, out) layout.
    """
    B, S = ids.shape
    E = emb_table.shape[1]
    H = w1.shape[2]
    T = w2.shape[2]
    Tp = ((T + 127) // 128) * 128           # lane-dense tag dim

    # How many sequences per grid step (bigger M for the MXU).
    Bblk = 1
    for cand in (8, 4, 2):
        if B % cand == 0:
            Bblk = cand
            break
    M = Bblk * S

    # Embedding lookup stays as a plain XLA gather at these sizes.
    # TODO(synk): at production sizes fuse this gather into the kernel via
    # scalar-prefetched ids + manual DMA row gather from HBM.
    emb = jnp.take(emb_table, ids, axis=0).astype(jnp.bfloat16)      # (B, S, E)

    # Conv weights: taps stacked along the contraction dim; tag dim zero-padded.
    w1r = w1.astype(jnp.bfloat16).reshape(3 * E, H)                  # (3E, H)
    w2p = jnp.pad(w2, ((0, 0), (0, 0), (0, Tp - T)))
    w2r = w2p.astype(jnp.bfloat16).reshape(3 * H, Tp)                # (3H, Tp)
    b1r = b1.astype(jnp.float32).reshape(1, H)
    b2p = jnp.full((1, Tp), -1e30, jnp.float32).at[0, :T].set(b2.astype(jnp.float32))

    # Block-diagonal shift matrices (zero at sequence boundaries).
    r = jnp.arange(M, dtype=jnp.int32)
    s_in_seq = r % S
    dmat = ((r[:, None] == r[None, :] + 1) &
            (s_in_seq[:, None] != 0)).astype(jnp.bfloat16)           # (M, M)
    umat = ((r[:, None] + 1 == r[None, :]) &
            (s_in_seq[None, :] != 0)).astype(jnp.bfloat16)           # (M, M)

    lens2 = lens.astype(jnp.int32).reshape(B, 1)

    grid_spec = pltpu.PrefetchScalarGridSpec(
        num_scalar_prefetch=0,
        grid=(B // Bblk,),
        in_specs=[
            pl.BlockSpec((Bblk, S, E), lambda i: (i, 0, 0)),   # emb
            pl.BlockSpec((Bblk, 1), lambda i: (i, 0)),         # lens
            pl.BlockSpec((M, M), lambda i: (0, 0)),            # shift D
            pl.BlockSpec((M, M), lambda i: (0, 0)),            # shift U
            pl.BlockSpec((3 * E, H), lambda i: (0, 0)),        # w1r
            pl.BlockSpec((1, H), lambda i: (0, 0)),            # b1
            pl.BlockSpec((3 * H, Tp), lambda i: (0, 0)),       # w2r
            pl.BlockSpec((1, Tp), lambda i: (0, 0)),           # b2 (padded)
        ],
        out_specs=pl.BlockSpec((Bblk, S, Tp), lambda i: (i, 0, 0)),
    )

    out = pl.pallas_call(
        cnn_crf_kernel,
        out_shape=jax.ShapeDtypeStruct((B, S, Tp), jnp.float32),
        grid_spec=grid_spec,
        compiler_params=pltpu.CompilerParams(
            dimension_semantics=("parallel",),      # batch axis is independent
            vmem_limit_bytes=32 * 1024 * 1024,
        ),
    )(emb, lens2, dmat, umat, w1r, b1r, w2r, b2p)

    return out[:, :, :T]


def reference_forward(ids, lens, emb_table, w1, b1, w2, b2):
    """Pure-JAX reference mirroring the PyTorch forward (crf == identity),
    with the same bf16-operand / f32-accumulate numerics as the kernel."""
    B, S = ids.shape
    emb = jnp.take(emb_table, ids, axis=0).astype(jnp.bfloat16)
    w1b = w1.astype(jnp.bfloat16)
    w2b = w2.astype(jnp.bfloat16)

    xp = jnp.pad(emb, ((0, 0), (1, 1), (0, 0)))
    h = sum(jnp.einsum('bse,eh->bsh', xp[:, t:t + S], w1b[t],
                       preferred_element_type=jnp.float32) for t in range(3))
    h = jnp.maximum(h + b1.astype(jnp.float32), 0.0).astype(jnp.bfloat16)

    hp = jnp.pad(h, ((0, 0), (1, 1), (0, 0)))
    y = sum(jnp.einsum('bsh,ht->bst', hp[:, t:t + S], w2b[t],
                       preferred_element_type=jnp.float32) for t in range(3))
    y = y + b2.astype(jnp.float32)

    p = jax.nn.softmax(y, axis=-1)
    mask = jnp.arange(S)[None, :, None] < lens[:, None, None]
    return jnp.where(mask, p, 0.0)


if __name__ == "__main__":
    # Small shapes consistent with the module (hidden_dim fixed at 128).
    B, S = 16, 16
    char_num = 50
    E = 128          # embedding_dim (module default)
    H = 128          # hidden_dim (fixed in module)
    T = 8            # tag_class

    key = jax.random.PRNGKey(0)
    k_emb, k_w1, k_b1, k_w2, k_b2, k_ids, k_len = jax.random.split(key, 7)

    emb_table = jax.random.normal(k_emb, (char_num + 1, E), jnp.float32) * 0.1
    w1 = jax.random.normal(k_w1, (3, E, H), jnp.float32) * ((3.0 * E) ** -0.5)
    b1 = jax.random.normal(k_b1, (H,), jnp.float32) * 0.01
    w2 = jax.random.normal(k_w2, (3, H, T), jnp.float32) * ((3.0 * H) ** -0.5)
    b2 = jax.random.normal(k_b2, (T,), jnp.float32) * 0.01

    ids = jax.random.randint(k_ids, (B, S), 0, char_num + 1, dtype=jnp.int32)
    lens = jax.random.randint(k_len, (B,), 1, S + 1, dtype=jnp.int32)

    out = cnn_crf_forward(ids, lens, emb_table, w1, b1, w2, b2)
    out = jax.block_until_ready(out)

    ref = reference_forward(ids, lens, emb_table, w1, b1, w2, b2)
    assert out.shape == (B, S, T), out.shape
    assert jnp.allclose(out, ref, atol=2e-3, rtol=2e-3), "mismatch vs reference"

    print("KERNEL_OK")
</pallas_src>

<mosaic_0001>
module attributes {stable_mosaic.version = 11 : i64} {
  func.func @cnn_crf_kernel(%arg0: i32, %arg1: memref<8x16x128xbf16, #tpu.memory_space<vmem>>, %arg2: memref<8x1xi32, #tpu.memory_space<vmem>>, %arg3: memref<128x128xbf16, #tpu.memory_space<vmem>>, %arg4: memref<128x128xbf16, #tpu.memory_space<vmem>>, %arg5: memref<384x128xbf16, #tpu.memory_space<vmem>>, %arg6: memref<1x128xf32, #tpu.memory_space<vmem>>, %arg7: memref<384x128xbf16, #tpu.memory_space<vmem>>, %arg8: memref<1x128xf32, #tpu.memory_space<vmem>>, %arg9: memref<8x16x128xf32, #tpu.memory_space<vmem>>) attributes {dimension_semantics = [#tpu.dimension_semantics<parallel>], iteration_bounds = array<i64: 2>, scalar_prefetch = 0 : i64, scratch_operands = 0 : i64, tpu.core_type = #tpu.core_type<tc>, window_params = [{transform_indices = @transform_0, window_bounds = array<i64: 8, 16, 128>}, {transform_indices = @transform_1, window_bounds = array<i64: 8, 1>}, {pipeline_mode = #tpu.pipeline_mode<synchronous>, transform_indices = @transform_2, window_bounds = array<i64: 128, 128>}, {pipeline_mode = #tpu.pipeline_mode<synchronous>, transform_indices = @transform_3, window_bounds = array<i64: 128, 128>}, {pipeline_mode = #tpu.pipeline_mode<synchronous>, transform_indices = @transform_4, window_bounds = array<i64: 384, 128>}, {pipeline_mode = #tpu.pipeline_mode<synchronous>, transform_indices = @transform_5, window_bounds = array<i64: 1, 128>}, {pipeline_mode = #tpu.pipeline_mode<synchronous>, transform_indices = @transform_6, window_bounds = array<i64: 384, 128>}, {pipeline_mode = #tpu.pipeline_mode<synchronous>, transform_indices = @transform_7, window_bounds = array<i64: 1, 128>}, {transform_indices = @transform_8, window_bounds = array<i64: 8, 16, 128>}]} {
    %c0 = arith.constant 0 : index
    %c0_0 = arith.constant 0 : index
    %c0_1 = arith.constant 0 : index
    %0 = vector.load %arg1[%c0, %c0_0, %c0_1] : memref<8x16x128xbf16, #tpu.memory_space<vmem>>, vector<8x16x128xbf16>
    %1 = vector.shape_cast %0 : vector<8x16x128xbf16> to vector<128x128xbf16>
    %c0_2 = arith.constant 0 : index
    %c0_3 = arith.constant 0 : index
    %2 = vector.load %arg3[%c0_2, %c0_3] : memref<128x128xbf16, #tpu.memory_space<vmem>>, vector<128x128xbf16>
    %c0_4 = arith.constant 0 : index
    %c0_5 = arith.constant 0 : index
    %3 = vector.load %arg4[%c0_4, %c0_5] : memref<128x128xbf16, #tpu.memory_space<vmem>>, vector<128x128xbf16>
    %cst = arith.constant dense<0.000000e+00> : vector<128x128xf32>
    %4 = tpu.matmul %2, %1, %cst {dimension_numbers = #tpu.dot_dimension_numbers<[1], [0], [0], [1], [0, 0, 1, 1], [], []>} : vector<128x128xbf16>, vector<128x128xbf16>, vector<128x128xf32> -> vector<128x128xf32>
    %5 = arith.truncf %4 : vector<128x128xf32> to vector<128x128xbf16>
    %cst_6 = arith.constant dense<0.000000e+00> : vector<128x128xf32>
    %6 = tpu.matmul %3, %1, %cst_6 {dimension_numbers = #tpu.dot_dimension_numbers<[1], [0], [0], [1], [0, 0, 1, 1], [], []>} : vector<128x128xbf16>, vector<128x128xbf16>, vector<128x128xf32> -> vector<128x128xf32>
    %7 = arith.truncf %6 : vector<128x128xf32> to vector<128x128xbf16>
    %8 = tpu.concatenate %5, %1, %7 in 1 : vector<128x128xbf16>, vector<128x128xbf16>, vector<128x128xbf16> -> vector<128x384xbf16>
    %c0_7 = arith.constant 0 : index
    %c0_8 = arith.constant 0 : index
    %9 = vector.load %arg5[%c0_7, %c0_8] : memref<384x128xbf16, #tpu.memory_space<vmem>>, vector<384x128xbf16>
    %cst_9 = arith.constant dense<0.000000e+00> : vector<128x128xf32>
    %10 = tpu.matmul %8, %9, %cst_9 {dimension_numbers = #tpu.dot_dimension_numbers<[1], [0], [0], [1], [0, 0, 1, 1], [], []>} : vector<128x384xbf16>, vector<384x128xbf16>, vector<128x128xf32> -> vector<128x128xf32>
    %c0_10 = arith.constant 0 : index
    %c0_11 = arith.constant 0 : index
    %11 = vector.load %arg6[%c0_10, %c0_11] : memref<1x128xf32, #tpu.memory_space<vmem>>, vector<1x128xf32>
    %12 = vector.broadcast %11 : vector<1x128xf32> to vector<128x128xf32>
    %13 = arith.addf %10, %12 : vector<128x128xf32>
    %cst_12 = arith.constant 0.000000e+00 : f32
    %14 = vector.broadcast %cst_12 : f32 to vector<128x128xf32>
    %15 = arith.maximumf %13, %14 : vector<128x128xf32>
    %16 = arith.truncf %15 : vector<128x128xf32> to vector<128x128xbf16>
    %cst_13 = arith.constant dense<0.000000e+00> : vector<128x128xf32>
    %17 = tpu.matmul %2, %16, %cst_13 {dimension_numbers = #tpu.dot_dimension_numbers<[1], [0], [0], [1], [0, 0, 1, 1], [], []>} : vector<128x128xbf16>, vector<128x128xbf16>, vector<128x128xf32> -> vector<128x128xf32>
    %18 = arith.truncf %17 : vector<128x128xf32> to vector<128x128xbf16>
    %cst_14 = arith.constant dense<0.000000e+00> : vector<128x128xf32>
    %19 = tpu.matmul %3, %16, %cst_14 {dimension_numbers = #tpu.dot_dimension_numbers<[1], [0], [0], [1], [0, 0, 1, 1], [], []>} : vector<128x128xbf16>, vector<128x128xbf16>, vector<128x128xf32> -> vector<128x128xf32>
    %20 = arith.truncf %19 : vector<128x128xf32> to vector<128x128xbf16>
    %21 = tpu.concatenate %18, %16, %20 in 1 : vector<128x128xbf16>, vector<128x128xbf16>, vector<128x128xbf16> -> vector<128x384xbf16>
    %c0_15 = arith.constant 0 : index
    %c0_16 = arith.constant 0 : index
    %22 = vector.load %arg7[%c0_15, %c0_16] : memref<384x128xbf16, #tpu.memory_space<vmem>>, vector<384x128xbf16>
    %cst_17 = arith.constant dense<0.000000e+00> : vector<128x128xf32>
    %23 = tpu.matmul %21, %22, %cst_17 {dimension_numbers = #tpu.dot_dimension_numbers<[1], [0], [0], [1], [0, 0, 1, 1], [], []>} : vector<128x384xbf16>, vector<384x128xbf16>, vector<128x128xf32> -> vector<128x128xf32>
    %c0_18 = arith.constant 0 : index
    %c0_19 = arith.constant 0 : index
    %24 = vector.load %arg8[%c0_18, %c0_19] : memref<1x128xf32, #tpu.memory_space<vmem>>, vector<1x128xf32>
    %25 = vector.broadcast %24 : vector<1x128xf32> to vector<128x128xf32>
    %26 = arith.addf %23, %25 : vector<128x128xf32>
    %cst_20 = arith.constant dense<0xFF800000> : vector<128xf32>
    %27 = vector.multi_reduction <maximumf>, %26, %cst_20 [1] : vector<128x128xf32> to vector<128xf32>
    %28 = vector.shape_cast %27 : vector<128xf32> to vector<128x1xf32>
    %29 = vector.broadcast %28 : vector<128x1xf32> to vector<128x128xf32>
    %30 = arith.subf %26, %29 : vector<128x128xf32>
    %31 = math.exp %30 : vector<128x128xf32>
    %cst_21 = arith.constant dense<0.000000e+00> : vector<128xf32>
    %32 = vector.multi_reduction <add>, %31, %cst_21 [1] : vector<128x128xf32> to vector<128xf32>
    %33 = vector.shape_cast %32 : vector<128xf32> to vector<128x1xf32>
    %34 = tpu.reciprocal %33 {approx = true} : vector<128x1xf32> -> vector<128x1xf32>
    %35 = vector.broadcast %34 : vector<128x1xf32> to vector<128x128xf32>
    %36 = arith.mulf %31, %35 : vector<128x128xf32>
    %37 = vector.shape_cast %36 : vector<128x128xf32> to vector<8x16x128xf32>
    %38 = tpu.iota {dimensions = array<i32: 1>} : vector<8x16x128xi32>
    %c0_22 = arith.constant 0 : index
    %c0_23 = arith.constant 0 : index
    %39 = vector.load %arg2[%c0_22, %c0_23] : memref<8x1xi32, #tpu.memory_space<vmem>>, vector<8x1xi32>
    %40 = vector.shape_cast %39 : vector<8x1xi32> to vector<8x1x1xi32>
    %41 = vector.broadcast %40 : vector<8x1x1xi32> to vector<8x16x128xi32>
    %42 = arith.cmpi slt, %38, %41 : vector<8x16x128xi32>
    %cst_24 = arith.constant 0.000000e+00 : f32
    %43 = vector.broadcast %cst_24 : f32 to vector<8x16x128xf32>
    %44 = arith.select %42, %37, %43 : vector<8x16x128xi1>, vector<8x16x128xf32>
    %c0_25 = arith.constant 0 : index
    %c0_26 = arith.constant 0 : index
    %c0_27 = arith.constant 0 : index
    %45 = vector.load %arg9[%c0_25, %c0_26, %c0_27] : memref<8x16x128xf32, #tpu.memory_space<vmem>>, vector<8x16x128xf32>
    tpu.vector_store %arg9[%c0_25, %c0_26, %c0_27], %44 {strides = array<i32>} : memref<8x16x128xf32, #tpu.memory_space<vmem>>, vector<8x16x128xf32>,
    return
  }
  func.func @transform_0(%arg0: i32) -> (i32, i32, i32) {
    %c0_i32 = arith.constant 0 : i32
    %c0_i32_0 = arith.constant 0 : i32
    %c0_i32_1 = arith.constant 0 : i32
    return %arg0, %c0_i32, %c0_i32_0 : i32, i32, i32
  }
  func.func @transform_1(%arg0: i32) -> (i32, i32) {
    %c0_i32 = arith.constant 0 : i32
    %c0_i32_0 = arith.constant 0 : i32
    return %arg0, %c0_i32 : i32, i32
  }
  func.func @transform_2(%arg0: i32) -> (i32, i32) {
    %c0_i32 = arith.constant 0 : i32
    %c0_i32_0 = arith.constant 0 : i32
    %c0_i32_1 = arith.constant 0 : i32
    return %c0_i32, %c0_i32_0 : i32, i32
  }
  func.func @transform_3(%arg0: i32) -> (i32, i32) {
    %c0_i32 = arith.constant 0 : i32
    %c0_i32_0 = arith.constant 0 : i32
    %c0_i32_1 = arith.constant 0 : i32
    return %c0_i32, %c0_i32_0 : i32, i32
  }
  func.func @transform_4(%arg0: i32) -> (i32, i32) {
    %c0_i32 = arith.constant 0 : i32
    %c0_i32_0 = arith.constant 0 : i32
    %c0_i32_1 = arith.constant 0 : i32
    return %c0_i32, %c0_i32_0 : i32, i32
  }
  func.func @transform_5(%arg0: i32) -> (i32, i32) {
    %c0_i32 = arith.constant 0 : i32
    %c0_i32_0 = arith.constant 0 : i32
    %c0_i32_1 = arith.constant 0 : i32
    return %c0_i32, %c0_i32_0 : i32, i32
  }
  func.func @transform_6(%arg0: i32) -> (i32, i32) {
    %c0_i32 = arith.constant 0 : i32
    %c0_i32_0 = arith.constant 0 : i32
    %c0_i32_1 = arith.constant 0 : i32
    return %c0_i32, %c0_i32_0 : i32, i32
  }
  func.func @transform_7(%arg0: i32) -> (i32, i32) {
    %c0_i32 = arith.constant 0 : i32
    %c0_i32_0 = arith.constant 0 : i32
    %c0_i32_1 = arith.constant 0 : i32
    return %c0_i32, %c0_i32_0 : i32, i32
  }
  func.func @transform_8(%arg0: i32) -> (i32, i32, i32) {
    %c0_i32 = arith.constant 0 : i32
    %c0_i32_0 = arith.constant 0 : i32
    %c0_i32_1 = arith.constant 0 : i32
    return %arg0, %c0_i32, %c0_i32_0 : i32, i32, i32
  }
}

</mosaic_0001>

<llo_original>
// kernel: tpu_custom_call.1
$region0: #{tpu_custom_call.1}
  #allocation0 [shape = 'u32[]', space=smem, size = 0x4, offset = 0x4, fixed_abs, tag = 'smem constant byte address 0x4 - core index']
  #allocation1 [shape = 'u32[144,128]{1,0:T(1,128)}', space=vmem, size = 0x12000, scoped, tag = 'internal scratch']
  %s0 = inlined_call_operand.hbm [shape: bf16[16,16,128], index: 0, kind: input, shape index: {}]
  %s1 = inlined_call_operand.vmem [shape: s32[16,1], index: 1, kind: input, shape index: {}]
  %s2 = inlined_call_operand.hbm [shape: bf16[128,128], index: 2, kind: input, shape index: {}]
  %s3 = inlined_call_operand.hbm [shape: bf16[128,128], index: 3, kind: input, shape index: {}]
  %s4 = inlined_call_operand.hbm [shape: bf16[384,128], index: 4, kind: input, shape index: {}]
  %s5 = inlined_call_operand.vmem [shape: f32[1,128], index: 5, kind: input, shape index: {}]
  %s6 = inlined_call_operand.hbm [shape: bf16[384,128], index: 6, kind: input, shape index: {}]
  %s7 = inlined_call_operand.vmem [shape: f32[1,128], index: 7, kind: input, shape index: {}]
  %s8 = inlined_call_operand.hbm [shape: f32[16,16,128], index: 8, kind: output, shape index: {}]
  %s9 = sld [smem:[#allocation0]]
  $region85: #{tpu_custom_call.1} parent=0
    _
  %s11 = ssub.s32 1, %s9
  %s12 = scalar_select 0, %s11, %s9
  $region1: #{tpu_custom_call.1} parent=0
    #allocation2 [shape = 'u8[65536]{0}', space=vmem, size = 0x10000, scoped, tag = 'input window, operand 0']
    #allocation3 [shape = 's32[2]{0}', space=sflag, size = 0x8, scoped, tag = 'scoped memory for tpu_custom_call.1']
    #allocation4 [shape = 's32[2]{0}', space=sflag, size = 0x8, scoped, tag = 'scoped memory for tpu_custom_call.1']
    #allocation5 [shape = 'u8[32768]{0}', space=vmem, size = 0x8000, scoped, tag = 'input window, operand 2, single buffered']
    #allocation6 [shape = 's32[1]{0}', space=sflag, size = 0x4, scoped, tag = 'scoped memory for tpu_custom_call.1']
    #allocation7 [shape = 'u8[32768]{0}', space=vmem, size = 0x8000, scoped, tag = 'input window, operand 3, single buffered']
    #allocation8 [shape = 'u8[98304]{0}', space=vmem, size = 0x18000, scoped, tag = 'input window, operand 4, single buffered']
    #allocation9 [shape = 's32[1]{0}', space=sflag, size = 0x4, scoped, tag = 'scoped memory for tpu_custom_call.1']
    #allocation10 [shape = 'u8[98304]{0}', space=vmem, size = 0x18000, scoped, tag = 'input window, operand 6, single buffered']
    #allocation11 [shape = 'u8[131072]{0}', space=vmem, size = 0x20000, scoped, tag = 'output window, operand 0']
    %13 = vsyncpa [#allocation3], 0
    %s14 = scalar_lea.sflag [#allocation3], 1
    %15 = vsyncpa %s14, 0
    %16 = vsyncpa [#allocation6], 0
    %17 = vsyncpa [#allocation9], 0
    %18 = vsyncpa [#allocation4], 0
    %s19 = scalar_lea.sflag [#allocation4], 1
    %20 = vsyncpa %s19, 0
    loop: start=0, step=1, limit=4
    $region2: #{tpu_custom_call.1} parent=1 // loop_pre_header
      _
    $region3: #{tpu_custom_call.1} parent=1 // loop_header
      %s22 = sphi 0, %s26
      %p23 = scmp.ge.s32.totalorder %s22, 4
      %s32 = sphi 0, %s34
      %s35 = sphi 0, %s32
      %s36 = sphi 0, %s35
      %s52 = sphi 0, %s36
      %s58 = sphi 0, %s60
      %s61 = sphi 0, %s58
      %s62 = sphi 0, %s61
      %s78 = sphi 0, %s62
      %s82 = sphi 0, %s82
      %s84 = sphi 0, %s82
      %s85 = sphi 0, %s84
      %s99 = sphi 0, %s85
      %s103 = sphi 0, %s103
      %s105 = sphi 0, %s103
      %s106 = sphi 0, %s105
      %s120 = sphi 0, %s106
      %s124 = sphi 0, %s124
      %s126 = sphi 0, %s124
      %s127 = sphi 0, %s126
      %s141 = sphi 0, %s127
      %s145 = sphi 0, %s145
      %s147 = sphi 0, %s145
      %s148 = sphi 0, %s147
      %s162 = sphi 0, %s148
      %s166 = sphi 0, %s166
      %s168 = sphi 0, %s166
      %s169 = sphi 0, %s168
      %s183 = sphi 0, %s169
      %s187 = sphi 0, %s187
      %s189 = sphi 0, %s187
      %s190 = sphi 0, %s189
      %s204 = sphi 0, %s190
      %s210 = sphi 0, %s212
      %s213 = sphi 0, %s210
      %s214 = sphi 0, %s213
      %s230 = sphi 0, %s214
    $region4: #{tpu_custom_call.1} parent=1 // loop_header_branch
      %25 = sbr.rel (%p23) target = $region8
    $region5: #{tpu_custom_call.1} parent=1 // loop_body
      %s27 = ssub.s32 %s22, 1
      %s28 = ssub.s32 %s22, 2
      %s29 = sadd.s32 %s22, 1
      %s30 = ssub.s32 %s22, %s29
      %p31 = scmp.eq.s32.totalorder %s30, 0
      %s33 = sadd.s32 %s32, 1
      %s34 = scalar_select %p31, %s32, %s33
      %p37 = pneg %p31
      %p38 = scmp.eq.s32.totalorder %s22, 1
      %p39 = por %p37, %p38
      %p40 = scmp.ne.s32.totalorder %s32, %s35
      %p41 = scmp.eq.s32.totalorder %s22, 0
      %p42 = por %p40, %p41
      %p43 = scmp.ne.s32.totalorder %s32, %s35
      %p44 = scmp.eq.s32.totalorder %s27, 1
      %p45 = por %p43, %p44
      %p46 = scmp.ne.s32.totalorder %s35, %s36
      %p47 = scmp.eq.s32.totalorder %s27, 0
      %p48 = por %p46, %p47
      %p49 = scmp.ne.s32.totalorder %s35, %s36
      %p50 = scmp.eq.s32.totalorder %s28, 1
      %p51 = por %p49, %p50
      %p53 = scmp.ne.s32.totalorder %s36, %s52
      %p54 = scmp.eq.s32.totalorder %s28, 0
      %p55 = por %p53, %p54
      %s56 = ssub.s32 %s22, %s29
      %p57 = scmp.eq.s32.totalorder %s56, 0
      %s59 = sadd.s32 %s58, 1
      %s60 = scalar_select %p57, %s58, %s59
      %p63 = pneg %p57
      %p64 = scmp.eq.s32.totalorder %s22, 1
      %p65 = por %p63, %p64
      %p66 = scmp.ne.s32.totalorder %s58, %s61
      %p67 = scmp.eq.s32.totalorder %s22, 0
      %p68 = por %p66, %p67
      %p69 = scmp.ne.s32.totalorder %s58, %s61
      %p70 = scmp.eq.s32.totalorder %s27, 1
      %p71 = por %p69, %p70
      %p72 = scmp.ne.s32.totalorder %s61, %s62
      %p73 = scmp.eq.s32.totalorder %s27, 0
      %p74 = por %p72, %p73
      %p75 = scmp.ne.s32.totalorder %s61, %s62
      %p76 = scmp.eq.s32.totalorder %s28, 1
      %p77 = por %p75, %p76
      %p79 = scmp.ne.s32.totalorder %s62, %s78
      %p80 = scmp.eq.s32.totalorder %s28, 0
      %p81 = por %p79, %p80
      %s83 = sadd.s32 %s82, 1
      %p86 = scmp.eq.s32.totalorder %s22, 1
      %p87 = scmp.ne.s32.totalorder %s82, %s84
      %p88 = scmp.eq.s32.totalorder %s22, 0
      %p89 = por %p87, %p88
      %p90 = scmp.ne.s32.totalorder %s82, %s84
      %p91 = scmp.eq.s32.totalorder %s27, 1
      %p92 = por %p90, %p91
      %p93 = scmp.ne.s32.totalorder %s84, %s85
      %p94 = scmp.eq.s32.totalorder %s27, 0
      %p95 = por %p93, %p94
      %p96 = scmp.ne.s32.totalorder %s84, %s85
      %p97 = scmp.eq.s32.totalorder %s28, 1
      %p98 = por %p96, %p97
      %p100 = scmp.ne.s32.totalorder %s85, %s99
      %p101 = scmp.eq.s32.totalorder %s28, 0
      %p102 = por %p100, %p101
      %s104 = sadd.s32 %s103, 1
      %p107 = scmp.eq.s32.totalorder %s22, 1
      %p108 = scmp.ne.s32.totalorder %s103, %s105
      %p109 = scmp.eq.s32.totalorder %s22, 0
      %p110 = por %p108, %p109
      %p111 = scmp.ne.s32.totalorder %s103, %s105
      %p112 = scmp.eq.s32.totalorder %s27, 1
      %p113 = por %p111, %p112
      %p114 = scmp.ne.s32.totalorder %s105, %s106
      %p115 = scmp.eq.s32.totalorder %s27, 0
      %p116 = por %p114, %p115
      %p117 = scmp.ne.s32.totalorder %s105, %s106
      %p118 = scmp.eq.s32.totalorder %s28, 1
      %p119 = por %p117, %p118
      %p121 = scmp.ne.s32.totalorder %s106, %s120
      %p122 = scmp.eq.s32.totalorder %s28, 0
      %p123 = por %p121, %p122
      %s125 = sadd.s32 %s124, 1
      %p128 = scmp.eq.s32.totalorder %s22, 1
      %p129 = scmp.ne.s32.totalorder %s124, %s126
      %p130 = scmp.eq.s32.totalorder %s22, 0
      %p131 = por %p129, %p130
      %p132 = scmp.ne.s32.totalorder %s124, %s126
      %p133 = scmp.eq.s32.totalorder %s27, 1
      %p134 = por %p132, %p133
      %p135 = scmp.ne.s32.totalorder %s126, %s127
      %p136 = scmp.eq.s32.totalorder %s27, 0
      %p137 = por %p135, %p136
      %p138 = scmp.ne.s32.totalorder %s126, %s127
      %p139 = scmp.eq.s32.totalorder %s28, 1
      %p140 = por %p138, %p139
      %p142 = scmp.ne.s32.totalorder %s127, %s141
      %p143 = scmp.eq.s32.totalorder %s28, 0
      %p144 = por %p142, %p143
      %s146 = sadd.s32 %s145, 1
      %p149 = scmp.eq.s32.totalorder %s22, 1
      %p150 = scmp.ne.s32.totalorder %s145, %s147
      %p151 = scmp.eq.s32.totalorder %s22, 0
      %p152 = por %p150, %p151
      %p153 = scmp.ne.s32.totalorder %s145, %s147
      %p154 = scmp.eq.s32.totalorder %s27, 1
      %p155 = por %p153, %p154
      %p156 = scmp.ne.s32.totalorder %s147, %s148
      %p157 = scmp.eq.s32.totalorder %s27, 0
      %p158 = por %p156, %p157
      %p159 = scmp.ne.s32.totalorder %s147, %s148
      %p160 = scmp.eq.s32.totalorder %s28, 1
      %p161 = por %p159, %p160
      %p163 = scmp.ne.s32.totalorder %s148, %s162
      %p164 = scmp.eq.s32.totalorder %s28, 0
      %p165 = por %p163, %p164
      %s167 = sadd.s32 %s166, 1
      %p170 = scmp.eq.s32.totalorder %s22, 1
      %p171 = scmp.ne.s32.totalorder %s166, %s168
      %p172 = scmp.eq.s32.totalorder %s22, 0
      %p173 = por %p171, %p172
      %p174 = scmp.ne.s32.totalorder %s166, %s168
      %p175 = scmp.eq.s32.totalorder %s27, 1
      %p176 = por %p174, %p175
      %p177 = scmp.ne.s32.totalorder %s168, %s169
      %p178 = scmp.eq.s32.totalorder %s27, 0
      %p179 = por %p177, %p178
      %p180 = scmp.ne.s32.totalorder %s168, %s169
      %p181 = scmp.eq.s32.totalorder %s28, 1
      %p182 = por %p180, %p181
      %p184 = scmp.ne.s32.totalorder %s169, %s183
      %p185 = scmp.eq.s32.totalorder %s28, 0
      %p186 = por %p184, %p185
      %s188 = sadd.s32 %s187, 1
      %p191 = scmp.eq.s32.totalorder %s22, 1
      %p192 = scmp.ne.s32.totalorder %s187, %s189
      %p193 = scmp.eq.s32.totalorder %s22, 0
      %p194 = por %p192, %p193
      %p195 = scmp.ne.s32.totalorder %s187, %s189
      %p196 = scmp.eq.s32.totalorder %s27, 1
      %p197 = por %p195, %p196
      %p198 = scmp.ne.s32.totalorder %s189, %s190
      %p199 = scmp.eq.s32.totalorder %s27, 0
      %p200 = por %p198, %p199
      %p201 = scmp.ne.s32.totalorder %s189, %s190
      %p202 = scmp.eq.s32.totalorder %s28, 1
      %p203 = por %p201, %p202
      %p205 = scmp.ne.s32.totalorder %s190, %s204
      %p206 = scmp.eq.s32.totalorder %s28, 0
      %p207 = por %p205, %p206
      %s208 = ssub.s32 %s22, %s29
      %p209 = scmp.eq.s32.totalorder %s208, 0
      %s211 = sadd.s32 %s210, 1
      %s212 = scalar_select %p209, %s210, %s211
      %p215 = pneg %p209
      %p216 = scmp.eq.s32.totalorder %s22, 1
      %p217 = por %p215, %p216
      %p218 = scmp.ne.s32.totalorder %s210, %s213
      %p219 = scmp.eq.s32.totalorder %s22, 0
      %p220 = por %p218, %p219
      %p221 = scmp.ne.s32.totalorder %s210, %s213
      %p222 = scmp.eq.s32.totalorder %s27, 1
      %p223 = por %p221, %p222
      %p224 = scmp.ne.s32.totalorder %s213, %s214
      %p225 = scmp.eq.s32.totalorder %s27, 0
      %p226 = por %p224, %p225
      %p227 = scmp.ne.s32.totalorder %s213, %s214
      %p228 = scmp.eq.s32.totalorder %s28, 1
      %p229 = por %p227, %p228
      %p231 = scmp.ne.s32.totalorder %s214, %s230
      %p232 = scmp.eq.s32.totalorder %s28, 0
      %p233 = por %p231, %p232
      %p234 = scmp.le.s32.totalorder 1, %s22
      %p235 = scmp.lt.s32.totalorder %s22, 3
      %p236 = pnand %p234, %p235
      %p237 = pneg %p236
      // Predicated region
      $region9: #{tpu_custom_call.1} parent=5 // pred_check
        _
      $region10: #{tpu_custom_call.1} parent=5 // pred_check_branch
        %239 = sbr.rel (%p236) target = $region12
      $region11: #{tpu_custom_call.1} parent=5 // pred_region
        %s240 = ssub.s32 %s22, 1
        // Predicated region
        $region13: #{tpu_custom_call.1} parent=11 // pred_check
          %p241 = pneg %p95
        $region14: #{tpu_custom_call.1} parent=11 // pred_check_branch
          %243 = sbr.rel (%p241) target = $region16
        $region15: #{tpu_custom_call.1} parent=11 // pred_region
          %s245 = ssub.s32 1024, 1024
          %246 = vsyncadd [#allocation6], %s245
          %s247 = sshll.u32 [#allocation5], 4
          %s248 = int_to_ptr.vmem [resolvable:$true] %s247
          %253 = dma.hbm_to_vmem [thread:$0]  %s2, 1024, %s248, [#allocation6], 64, 64, 4
        $region16: #{tpu_custom_call.1} parent=11 // pred_fallthru
          _
        // Predicated region
        $region17: #{tpu_custom_call.1} parent=11 // pred_check
          %p254 = pneg %p116
        $region18: #{tpu_custom_call.1} parent=11 // pred_check_branch
          %256 = sbr.rel (%p254) target = $region20
        $region19: #{tpu_custom_call.1} parent=11 // pred_region
          %s258 = ssub.s32 1024, 1024
          %259 = vsyncadd [#allocation6], %s258
          %s260 = sshll.u32 [#allocation7], 4
          %s261 = int_to_ptr.vmem [resolvable:$true] %s260
          %266 = dma.hbm_to_vmem [thread:$0]  %s3, 1024, %s261, [#allocation6], 64, 64, 4
        $region20: #{tpu_custom_call.1} parent=11 // pred_fallthru
          _
        // Predicated region
        $region21: #{tpu_custom_call.1} parent=11 // pred_check
          %p267 = pneg %p137
        $region22: #{tpu_custom_call.1} parent=11 // pred_check_branch
          %269 = sbr.rel (%p267) target = $region24
        $region23: #{tpu_custom_call.1} parent=11 // pred_region
          %s271 = ssub.s32 3072, 3072
          %272 = vsyncadd [#allocation9], %s271
          %s273 = sshll.u32 [#allocation8], 4
          %s274 = int_to_ptr.vmem [resolvable:$true] %s273
          %279 = dma.hbm_to_vmem [thread:$0]  %s4, 3072, %s274, [#allocation9], 64, 64, 4
        $region24: #{tpu_custom_call.1} parent=11 // pred_fallthru
          _
        // Predicated region
        $region25: #{tpu_custom_call.1} parent=11 // pred_check
          %p280 = pneg %p158
        $region26: #{tpu_custom_call.1} parent=11 // pred_check_branch
          %282 = sbr.rel (%p280) target = $region28
        $region27: #{tpu_custom_call.1} parent=11 // pred_region
          _
        $region28: #{tpu_custom_call.1} parent=11 // pred_fallthru
          _
        // Predicated region
        $region29: #{tpu_custom_call.1} parent=11 // pred_check
          %p283 = pneg %p179
        $region30: #{tpu_custom_call.1} parent=11 // pred_check_branch
          %285 = sbr.rel (%p283) target = $region32
        $region31: #{tpu_custom_call.1} parent=11 // pred_region
          %s287 = ssub.s32 3072, 3072
          %288 = vsyncadd [#allocation9], %s287
          %s289 = sshll.u32 [#allocation10], 4
          %s290 = int_to_ptr.vmem [resolvable:$true] %s289
          %295 = dma.hbm_to_vmem [thread:$0]  %s6, 3072, %s290, [#allocation9], 64, 64, 4
        $region32: #{tpu_custom_call.1} parent=11 // pred_fallthru
          _
        // Predicated region
        $region33: #{tpu_custom_call.1} parent=11 // pred_check
          %p296 = pneg %p200
        $region34: #{tpu_custom_call.1} parent=11 // pred_check_branch
          %298 = sbr.rel (%p296) target = $region36
        $region35: #{tpu_custom_call.1} parent=11 // pred_region
          _
        $region36: #{tpu_custom_call.1} parent=11 // pred_fallthru
          _
      $region12: #{tpu_custom_call.1} parent=5 // pred_fallthru
        _
      %p299 = scmp.lt.s32.totalorder %s22, 2
      // Predicated region
      $region37: #{tpu_custom_call.1} parent=5 // pred_check
        %p300 = pneg %p299
      $region38: #{tpu_custom_call.1} parent=5 // pred_check_branch
        %302 = sbr.rel (%p300) target = $region40
      $region39: #{tpu_custom_call.1} parent=5 // pred_region
        // Predicated region
        $region41: #{tpu_custom_call.1} parent=39 // pred_check
          %p303 = pneg %p42
        $region42: #{tpu_custom_call.1} parent=39 // pred_check_branch
          %305 = sbr.rel (%p303) target = $region44
        $region43: #{tpu_custom_call.1} parent=39 // pred_region
          %s306 = sand.u32 %s32, 1
          %s307 = scalar_lea.sflag [#allocation3], %s306
          %s308 = sand.u32 %s32, 1
          %s309 = smul.addr %s308, 64
          %s310 = scalar_lea.vmem [#allocation2], %s309
          %s311 = smul.u32 8, %s22
          %s313 = ssub.s32 1024, 1024
          %314 = vsyncadd %s307, %s313
          %s315 = smul.addr %s311, 2
          %s316 = smul.addr %s315, 64
          %s317 = scalar_lea.hbm %s0, %s316
          %s318 = sshll.u32 %s310, 4
          %s319 = int_to_ptr.vmem [resolvable:$true] %s318
          %324 = dma.hbm_to_vmem [thread:$0]  %s317, 1024, %s319, %s307, 64, 64, 4
        $region44: #{tpu_custom_call.1} parent=39 // pred_fallthru
          _
        // Predicated region
        $region45: #{tpu_custom_call.1} parent=39 // pred_check
          %p325 = pneg %p68
        $region46: #{tpu_custom_call.1} parent=39 // pred_check_branch
          %327 = sbr.rel (%p325) target = $region48
        $region47: #{tpu_custom_call.1} parent=39 // pred_region
          %p328 = scmp.lt.s32.totalorder %s22, 1
          %s329 = scalar_select %p328, %s22, 1
          %s330 = smul.addr %s329, 8
          %s331 = scalar_lea.vmem %s1, %s330
        $region48: #{tpu_custom_call.1} parent=39 // pred_fallthru
          _
      $region40: #{tpu_custom_call.1} parent=5 // pred_fallthru
        _
      %p332 = scmp.le.s32.totalorder 1, %s22
      %p333 = scmp.lt.s32.totalorder %s22, 3
      %p334 = pnand %p332, %p333
      %p335 = pneg %p334
      // Predicated region
      $region49: #{tpu_custom_call.1} parent=5 // pred_check
        _
      $region50: #{tpu_custom_call.1} parent=5 // pred_check_branch
        %337 = sbr.rel (%p334) target = $region52
      $region51: #{tpu_custom_call.1} parent=5 // pred_region
        %s338 = ssub.s32 %s22, 1
        %s339 = sand.u32 %s35, 1
        %s340 = scalar_lea.sflag [#allocation3], %s339
        %s341 = sand.u32 %s35, 1
        %s342 = smul.addr %s341, 64
        %s343 = scalar_lea.vmem [#allocation2], %s342
        // Predicated region
        $region53: #{tpu_custom_call.1} parent=51 // pred_check
          %p344 = pneg %p48
        $region54: #{tpu_custom_call.1} parent=51 // pred_check_branch
          %346 = sbr.rel (%p344) target = $region56
        $region55: #{tpu_custom_call.1} parent=51 // pred_region
          %347 = dma.done %s340, 1024
        $region56: #{tpu_custom_call.1} parent=51 // pred_fallthru
          _
        // Predicated region
        $region57: #{tpu_custom_call.1} parent=51 // pred_check
          %p348 = pneg %p95
        $region58: #{tpu_custom_call.1} parent=51 // pred_check_branch
          %350 = sbr.rel (%p348) target = $region60
        $region59: #{tpu_custom_call.1} parent=51 // pred_region
          %351 = dma.done [#allocation6], 1024
        $region60: #{tpu_custom_call.1} parent=51 // pred_fallthru
          _
        // Predicated region
        $region61: #{tpu_custom_call.1} parent=51 // pred_check
          %p352 = pneg %p116
        $region62: #{tpu_custom_call.1} parent=51 // pred_check_branch
          %354 = sbr.rel (%p352) target = $region64
        $region63: #{tpu_custom_call.1} parent=51 // pred_region
          %355 = dma.done [#allocation6], 1024
        $region64: #{tpu_custom_call.1} parent=51 // pred_fallthru
          _
        // Predicated region
        $region65: #{tpu_custom_call.1} parent=51 // pred_check
          %p356 = pneg %p137
        $region66: #{tpu_custom_call.1} parent=51 // pred_check_branch
          %358 = sbr.rel (%p356) target = $region68
        $region67: #{tpu_custom_call.1} parent=51 // pred_region
          %359 = dma.done [#allocation9], 3072
        $region68: #{tpu_custom_call.1} parent=51 // pred_fallthru
          _
        // Predicated region
        $region69: #{tpu_custom_call.1} parent=51 // pred_check
          %p360 = pneg %p179
        $region70: #{tpu_custom_call.1} parent=51 // pred_check_branch
          %362 = sbr.rel (%p360) target = $region72
        $region71: #{tpu_custom_call.1} parent=51 // pred_region
          %363 = dma.done [#allocation9], 3072
        $region72: #{tpu_custom_call.1} parent=51 // pred_fallthru
          _
        %s364 = sand.u32 %s35, 1
        %s365 = scalar_lea.sflag [#allocation3], %s364
        %s366 = sand.u32 %s35, 1
        %s367 = smul.addr %s366, 64
        %s368 = scalar_lea.vmem [#allocation2], %s367
        %p369 = pneg %p48
        %p370 = pneg %p45
        %p371 = scmp.lt.s32.totalorder %s27, 1
        %s372 = scalar_select %p371, %s27, 1
        %s373 = smul.addr %s372, 8
        %s374 = scalar_lea.vmem %s1, %s373
        %p375 = pneg %p74
        %p376 = pneg %p71
        %p377 = pneg %p95
        %p378 = pneg %p92
        %p379 = pneg %p116
        %p380 = pneg %p113
        %p381 = pneg %p137
        %p382 = pneg %p134
        %p383 = pneg %p158
        %p384 = pneg %p155
        %p385 = pneg %p179
        %p386 = pneg %p176
        %p387 = pneg %p200
        %p388 = pneg %p197
        %p389 = pneg %p226
        %p390 = pneg %p223
        %s391 = sand.u32 %s213, 1
        %s392 = scalar_lea.sflag [#allocation4], %s391
        %s393 = sand.u32 %s213, 1
        %s394 = smul.addr %s393, 128
        %s395 = scalar_lea.vmem [#allocation11], %s394
        %s396 = smul.u32 8, %s27
        %p397 = scmp.lt.s32.totalorder %s27, 1
        %s398 = scalar_select %p397, %s27, 1
        %s399 = smul.addr %s398, 8
        %s400 = scalar_lea.vmem %s1, %s399
        %s401 = smul.u32 8, %s27
        %v403 = vld [vmem:[%s343] sm:$0xf]
        %v404 = vld [vmem:[%s343 + $0x4] sm:$0xf]
        %v405 = vld [vmem:[%s343 + $0x8] sm:$0xf]
        %v406 = vld [vmem:[%s343 + $0xc] sm:$0xf]
        %v407 = vld [vmem:[%s343 + $0x10] sm:$0xf]
        %v408 = vld [vmem:[%s343 + $0x14] sm:$0xf]
        %v409 = vld [vmem:[%s343 + $0x18] sm:$0xf]
        %v410 = vld [vmem:[%s343 + $0x1c] sm:$0xf]
        %v411 = vld [vmem:[%s343 + $0x20] sm:$0xf]
        %v412 = vld [vmem:[%s343 + $0x24] sm:$0xf]
        %v413 = vld [vmem:[%s343 + $0x28] sm:$0xf]
        %v414 = vld [vmem:[%s343 + $0x2c] sm:$0xf]
        %v415 = vld [vmem:[%s343 + $0x30] sm:$0xf]
        %v416 = vld [vmem:[%s343 + $0x34] sm:$0xf]
        %v417 = vld [vmem:[%s343 + $0x38] sm:$0xf]
        %v418 = vld [vmem:[%s343 + $0x3c] sm:$0xf]
        %v419 = vld [vmem:[#allocation5] sm:$0xf]
        %v420 = vld [vmem:[#allocation5 + $0x4] sm:$0xf]
        %v421 = vld [vmem:[#allocation5 + $0x8] sm:$0xf]
        %v422 = vld [vmem:[#allocation5 + $0xc] sm:$0xf]
        %v423 = vld [vmem:[#allocation5 + $0x10] sm:$0xf]
        %v424 = vld [vmem:[#allocation5 + $0x14] sm:$0xf]
        %v425 = vld [vmem:[#allocation5 + $0x18] sm:$0xf]
        %v426 = vld [vmem:[#allocation5 + $0x1c] sm:$0xf]
        %v427 = vld [vmem:[#allocation5 + $0x20] sm:$0xf]
        %v428 = vld [vmem:[#allocation5 + $0x24] sm:$0xf]
        %v429 = vld [vmem:[#allocation5 + $0x28] sm:$0xf]
        %v430 = vld [vmem:[#allocation5 + $0x2c] sm:$0xf]
        %v431 = vld [vmem:[#allocation5 + $0x30] sm:$0xf]
        %v432 = vld [vmem:[#allocation5 + $0x34] sm:$0xf]
        %v433 = vld [vmem:[#allocation5 + $0x38] sm:$0xf]
        %v434 = vld [vmem:[#allocation5 + $0x3c] sm:$0xf]
        %v435 = vld [vmem:[#allocation7] sm:$0xf]
        %v436 = vld [vmem:[#allocation7 + $0x4] sm:$0xf]
        %v437 = vld [vmem:[#allocation7 + $0x8] sm:$0xf]
        %v438 = vld [vmem:[#allocation7 + $0xc] sm:$0xf]
        %v439 = vld [vmem:[#allocation7 + $0x10] sm:$0xf]
        %v440 = vld [vmem:[#allocation7 + $0x14] sm:$0xf]
        %v441 = vld [vmem:[#allocation7 + $0x18] sm:$0xf]
        %v442 = vld [vmem:[#allocation7 + $0x1c] sm:$0xf]
        %v443 = vld [vmem:[#allocation7 + $0x20] sm:$0xf]
        %v444 = vld [vmem:[#allocation7 + $0x24] sm:$0xf]
        %v445 = vld [vmem:[#allocation7 + $0x28] sm:$0xf]
        %v446 = vld [vmem:[#allocation7 + $0x2c] sm:$0xf]
        %v447 = vld [vmem:[#allocation7 + $0x30] sm:$0xf]
        %v448 = vld [vmem:[#allocation7 + $0x34] sm:$0xf]
        %v449 = vld [vmem:[#allocation7 + $0x38] sm:$0xf]
        %v450 = vld [vmem:[#allocation7 + $0x3c] sm:$0xf]
        %v467 = vunpack.c.l.b16 %v419
        %v468 = vunpack.c.l.b16 %v420
        %v469 = vunpack.c.l.b16 %v421
        %v470 = vunpack.c.l.b16 %v422
        %v471 = vunpack.c.l.b16 %v423
        %v472 = vunpack.c.l.b16 %v424
        %v473 = vunpack.c.l.b16 %v425
        %v474 = vunpack.c.l.b16 %v426
        %v475 = vunpack.c.l.b16 %v427
        %v476 = vunpack.c.l.b16 %v428
        %v477 = vunpack.c.l.b16 %v429
        %v478 = vunpack.c.l.b16 %v430
        %v479 = vunpack.c.l.b16 %v431
        %v480 = vunpack.c.l.b16 %v432
        %v481 = vunpack.c.l.b16 %v433
        %v482 = vunpack.c.l.b16 %v434
        %v483 = vpack.c.b16 %v468, %v467
        %v484 = vpack.c.b16 %v470, %v469
        %v485 = vpack.c.b16 %v472, %v471
        %v486 = vpack.c.b16 %v474, %v473
        %v487 = vpack.c.b16 %v476, %v475
        %v488 = vpack.c.b16 %v478, %v477
        %v489 = vpack.c.b16 %v480, %v479
        %v490 = vpack.c.b16 %v482, %v481
        %v515 = vunpack.c.l.b16 %v403
        %v516 = vunpack.c.l.b16 %v404
        %v517 = vunpack.c.l.b16 %v405
        %v518 = vunpack.c.l.b16 %v406
        %v519 = vunpack.c.l.b16 %v407
        %v520 = vunpack.c.l.b16 %v408
        %v521 = vunpack.c.l.b16 %v409
        %v522 = vunpack.c.l.b16 %v410
        %v523 = vunpack.c.l.b16 %v411
        %v524 = vunpack.c.l.b16 %v412
        %v525 = vunpack.c.l.b16 %v413
        %v526 = vunpack.c.l.b16 %v414
        %v527 = vunpack.c.l.b16 %v415
        %v528 = vunpack.c.l.b16 %v416
        %v529 = vunpack.c.l.b16 %v417
        %v530 = vunpack.c.l.b16 %v418
        %v531 = vpack.c.b16 %v516, %v515
        %v532 = vpack.c.b16 %v518, %v517
        %v533 = vpack.c.b16 %v520, %v519
        %v534 = vpack.c.b16 %v522, %v521
        %v535 = vpack.c.b16 %v524, %v523
        %v536 = vpack.c.b16 %v526, %v525
        %v537 = vpack.c.b16 %v528, %v527
        %v538 = vpack.c.b16 %v530, %v529
        %547 = vmatprep.subr.bf16.mxu0 0
        %548 = vmatpush1.bf16.msra.mxu0 %v531
        %549 = vmatprep.subr.bf16.mxu0 0
        %550 = vmatpush1.bf16.msra.mxu0 %v532
        %551 = vmatprep.subr.bf16.mxu0 0
        %552 = vmatpush1.bf16.msra.mxu0 %v533
        %553 = vmatprep.subr.bf16.mxu0 0
        %554 = vmatpush1.bf16.msra.mxu0 %v534
        %555 = vmatprep.subr.bf16.mxu0 0
        %556 = vmatpush1.bf16.msra.mxu0 %v535
        %557 = vmatprep.subr.bf16.mxu0 0
        %558 = vmatpush1.bf16.msra.mxu0 %v536
        %559 = vmatprep.subr.bf16.mxu0 0
        %560 = vmatpush1.bf16.msra.mxu0 %v537
        %561 = vmatprep.subr.bf16.mxu0 0
        %562 = vmatpush1.bf16.msra.mxu0 %v538
        %563 = vmatprep.subr.bf16.mxu0 0
        %564 = vmatpush1.bf16.msra.mxu0 0
        %565 = vmatprep.subr.bf16.mxu0 0
        %566 = vmatpush1.bf16.msra.mxu0 0
        %567 = vmatprep.subr.bf16.mxu0 0
        %568 = vmatpush1.bf16.msra.mxu0 0
        %569 = vmatprep.subr.bf16.mxu0 0
        %570 = vmatpush1.bf16.msra.mxu0 0
        %571 = vmatprep.subr.bf16.mxu0 0
        %572 = vmatpush1.bf16.msra.mxu0 0
        %573 = vmatprep.subr.bf16.mxu0 0
        %574 = vmatpush1.bf16.msra.mxu0 0
        %575 = vmatprep.subr.bf16.mxu0 0
        %576 = vmatpush1.bf16.msra.mxu0 0
        %577 = vmatprep.subr.bf16.mxu0 0
        %578 = vmatpush1.bf16.msra.mxu0 0
        %579 = vmatprep.mubr.bf16.mxu0 0
        %580 = vmatmul.mubr.bf16.gmra.mrb[0].mxu0 %v483
        %v581 = vpop.f32.mrb[0].mxu0
        %v582 = vadd.f32 0.0, %v581
        %v583 = vpop.f32.mrb[0].mxu0
        %v584 = vpop.f32.mrb[0].mxu0
        %v585 = vadd.f32 0.0, %v584
        %v586 = vpop.f32.mrb[0].mxu0
        %587 = vmatprep.mubr.bf16.mxu0 0
        %588 = vmatmul.mubr.bf16.gmra.mrb[0].mxu0 %v484
        %v589 = vpop.f32.mrb[0].mxu0
        %v590 = vadd.f32 0.0, %v589
        %v591 = vpop.f32.mrb[0].mxu0
        %v592 = vpop.f32.mrb[0].mxu0
        %v593 = vadd.f32 0.0, %v592
        %v594 = vpop.f32.mrb[0].mxu0
        %595 = vmatprep.mubr.bf16.mxu0 0
        %596 = vmatmul.mubr.bf16.gmra.mrb[0].mxu0 %v485
        %v597 = vpop.f32.mrb[0].mxu0
        %v598 = vadd.f32 0.0, %v597
        %v599 = vpop.f32.mrb[0].mxu0
        %v600 = vpop.f32.mrb[0].mxu0
        %v601 = vadd.f32 0.0, %v600
        %v602 = vpop.f32.mrb[0].mxu0
        %603 = vmatprep.mubr.bf16.mxu0 0
        %604 = vmatmul.mubr.bf16.gmra.mrb[0].mxu0 %v486
        %v605 = vpop.f32.mrb[0].mxu0
        %v606 = vadd.f32 0.0, %v605
        %v607 = vpop.f32.mrb[0].mxu0
        %v608 = vpop.f32.mrb[0].mxu0
        %v609 = vadd.f32 0.0, %v608
        %v610 = vpop.f32.mrb[0].mxu0
        %611 = vmatprep.mubr.bf16.mxu0 0
        %612 = vmatmul.mubr.bf16.gmra.mrb[0].mxu0 %v487
        %v613 = vpop.f32.mrb[0].mxu0
        %v614 = vadd.f32 0.0, %v613
        %v615 = vpop.f32.mrb[0].mxu0
        %v616 = vpop.f32.mrb[0].mxu0
        %v617 = vadd.f32 0.0, %v616
        %v618 = vpop.f32.mrb[0].mxu0
        %619 = vmatprep.mubr.bf16.mxu0 0
        %620 = vmatmul.mubr.bf16.gmra.mrb[0].mxu0 %v488
        %v621 = vpop.f32.mrb[0].mxu0
        %v622 = vadd.f32 0.0, %v621
        %v623 = vpop.f32.mrb[0].mxu0
        %v624 = vpop.f32.mrb[0].mxu0
        %v625 = vadd.f32 0.0, %v624
        %v626 = vpop.f32.mrb[0].mxu0
        %627 = vmatprep.mubr.bf16.mxu0 0
        %628 = vmatmul.mubr.bf16.gmra.mrb[0].mxu0 %v489
        %v629 = vpop.f32.mrb[0].mxu0
        %v630 = vadd.f32 0.0, %v629
        %v631 = vpop.f32.mrb[0].mxu0
        %v632 = vpop.f32.mrb[0].mxu0
        %v633 = vadd.f32 0.0, %v632
        %v634 = vpop.f32.mrb[0].mxu0
        %635 = vmatprep.mubr.bf16.mxu0 0
        %636 = vmatmul.mubr.bf16.gmra.mrb[0].mxu0 %v490
        %v637 = vpop.f32.mrb[0].mxu0
        %v638 = vadd.f32 0.0, %v637
        %v639 = vpop.f32.mrb[0].mxu0
        %v640 = vpop.f32.mrb[0].mxu0
        %v641 = vadd.f32 0.0, %v640
        %v642 = vpop.f32.mrb[0].mxu0
        %643 = vdwg.mxu0
        %v644 = vpack.c.bf16 %v585, %v582
        %v645 = vpack.c.bf16 %v593, %v590
        %v646 = vpack.c.bf16 %v601, %v598
        %v647 = vpack.c.bf16 %v609, %v606
        %v648 = vpack.c.bf16 %v617, %v614
        %v649 = vpack.c.bf16 %v625, %v622
        %v650 = vpack.c.bf16 %v633, %v630
        %v651 = vpack.c.bf16 %v641, %v638
        %v668 = vunpack.c.l.b16 %v435
        %v669 = vunpack.c.l.b16 %v436
        %v670 = vunpack.c.l.b16 %v437
        %v671 = vunpack.c.l.b16 %v438
        %v672 = vunpack.c.l.b16 %v439
        %v673 = vunpack.c.l.b16 %v440
        %v674 = vunpack.c.l.b16 %v441
        %v675 = vunpack.c.l.b16 %v442
        %v676 = vunpack.c.l.b16 %v443
        %v677 = vunpack.c.l.b16 %v444
        %v678 = vunpack.c.l.b16 %v445
        %v679 = vunpack.c.l.b16 %v446
        %v680 = vunpack.c.l.b16 %v447
        %v681 = vunpack.c.l.b16 %v448
        %v682 = vunpack.c.l.b16 %v449
        %v683 = vunpack.c.l.b16 %v450
        %v684 = vpack.c.b16 %v669, %v668
        %v685 = vpack.c.b16 %v671, %v670
        %v686 = vpack.c.b16 %v673, %v672
        %v687 = vpack.c.b16 %v675, %v674
        %v688 = vpack.c.b16 %v677, %v676
        %v689 = vpack.c.b16 %v679, %v678
        %v690 = vpack.c.b16 %v681, %v680
        %v691 = vpack.c.b16 %v683, %v682
        %700 = vmatprep.subr.bf16.mxu0 0
        %701 = vmatpush1.bf16.msra.mxu0 %v531
        %702 = vmatprep.subr.bf16.mxu0 0
        %703 = vmatpush1.bf16.msra.mxu0 %v532
        %704 = vmatprep.subr.bf16.mxu0 0
        %705 = vmatpush1.bf16.msra.mxu0 %v533
        %706 = vmatprep.subr.bf16.mxu0 0
        %707 = vmatpush1.bf16.msra.mxu0 %v534
        %708 = vmatprep.subr.bf16.mxu0 0
        %709 = vmatpush1.bf16.msra.mxu0 %v535
        %710 = vmatprep.subr.bf16.mxu0 0
        %711 = vmatpush1.bf16.msra.mxu0 %v536
        %712 = vmatprep.subr.bf16.mxu0 0
        %713 = vmatpush1.bf16.msra.mxu0 %v537
        %714 = vmatprep.subr.bf16.mxu0 0
        %715 = vmatpush1.bf16.msra.mxu0 %v538
        %716 = vmatprep.subr.bf16.mxu0 0
        %717 = vmatpush1.bf16.msra.mxu0 0
        %718 = vmatprep.subr.bf16.mxu0 0
        %719 = vmatpush1.bf16.msra.mxu0 0
        %720 = vmatprep.subr.bf16.mxu0 0
        %721 = vmatpush1.bf16.msra.mxu0 0
        %722 = vmatprep.subr.bf16.mxu0 0
        %723 = vmatpush1.bf16.msra.mxu0 0
        %724 = vmatprep.subr.bf16.mxu0 0
        %725 = vmatpush1.bf16.msra.mxu0 0
        %726 = vmatprep.subr.bf16.mxu0 0
        %727 = vmatpush1.bf16.msra.mxu0 0
        %728 = vmatprep.subr.bf16.mxu0 0
        %729 = vmatpush1.bf16.msra.mxu0 0
        %730 = vmatprep.subr.bf16.mxu0 0
        %731 = vmatpush1.bf16.msra.mxu0 0
        %732 = vmatprep.mubr.bf16.mxu0 0
        %733 = vmatmul.mubr.bf16.gmra.mrb[0].mxu0 %v684
        %v734 = vpop.f32.mrb[0].mxu0
        %v735 = vadd.f32 0.0, %v734
        %v736 = vpop.f32.mrb[0].mxu0
        %v737 = vpop.f32.mrb[0].mxu0
        %v738 = vadd.f32 0.0, %v737
        %v739 = vpop.f32.mrb[0].mxu0
        %740 = vmatprep.mubr.bf16.mxu0 0
        %741 = vmatmul.mubr.bf16.gmra.mrb[0].mxu0 %v685
        %v742 = vpop.f32.mrb[0].mxu0
        %v743 = vadd.f32 0.0, %v742
        %v744 = vpop.f32.mrb[0].mxu0
        %v745 = vpop.f32.mrb[0].mxu0
        %v746 = vadd.f32 0.0, %v745
        %v747 = vpop.f32.mrb[0].mxu0
        %748 = vmatprep.mubr.bf16.mxu0 0
        %749 = vmatmul.mubr.bf16.gmra.mrb[0].mxu0 %v686
        %v750 = vpop.f32.mrb[0].mxu0
        %v751 = vadd.f32 0.0, %v750
        %v752 = vpop.f32.mrb[0].mxu0
        %v753 = vpop.f32.mrb[0].mxu0
        %v754 = vadd.f32 0.0, %v753
        %v755 = vpop.f32.mrb[0].mxu0
        %756 = vmatprep.mubr.bf16.mxu0 0
        %757 = vmatmul.mubr.bf16.gmra.mrb[0].mxu0 %v687
        %v758 = vpop.f32.mrb[0].mxu0
        %v759 = vadd.f32 0.0, %v758
        %v760 = vpop.f32.mrb[0].mxu0
        %v761 = vpop.f32.mrb[0].mxu0
        %v762 = vadd.f32 0.0, %v761
        %v763 = vpop.f32.mrb[0].mxu0
        %764 = vmatprep.mubr.bf16.mxu0 0
        %765 = vmatmul.mubr.bf16.gmra.mrb[0].mxu0 %v688
        %v766 = vpop.f32.mrb[0].mxu0
        %v767 = vadd.f32 0.0, %v766
        %v768 = vpop.f32.mrb[0].mxu0
        %v769 = vpop.f32.mrb[0].mxu0
        %v770 = vadd.f32 0.0, %v769
        %v771 = vpop.f32.mrb[0].mxu0
        %772 = vmatprep.mubr.bf16.mxu0 0
        %773 = vmatmul.mubr.bf16.gmra.mrb[0].mxu0 %v689
        %v774 = vpop.f32.mrb[0].mxu0
        %v775 = vadd.f32 0.0, %v774
        %v776 = vpop.f32.mrb[0].mxu0
        %v777 = vpop.f32.mrb[0].mxu0
        %v778 = vadd.f32 0.0, %v777
        %v779 = vpop.f32.mrb[0].mxu0
        %780 = vmatprep.mubr.bf16.mxu0 0
        %781 = vmatmul.mubr.bf16.gmra.mrb[0].mxu0 %v690
        %v782 = vpop.f32.mrb[0].mxu0
        %v783 = vadd.f32 0.0, %v782
        %v784 = vpop.f32.mrb[0].mxu0
        %v785 = vpop.f32.mrb[0].mxu0
        %v786 = vadd.f32 0.0, %v785
        %v787 = vpop.f32.mrb[0].mxu0
        %788 = vmatprep.mubr.bf16.mxu0 0
        %789 = vmatmul.mubr.bf16.gmra.mrb[0].mxu0 %v691
        %v790 = vpop.f32.mrb[0].mxu0
        %v791 = vadd.f32 0.0, %v790
        %v792 = vpop.f32.mrb[0].mxu0
        %v793 = vpop.f32.mrb[0].mxu0
        %v794 = vadd.f32 0.0, %v793
        %v795 = vpop.f32.mrb[0].mxu0
        %796 = vdwg.mxu0
        %v797 = vpack.c.bf16 %v738, %v735
        %v798 = vpack.c.bf16 %v746, %v743
        %v799 = vpack.c.bf16 %v754, %v751
        %v800 = vpack.c.bf16 %v762, %v759
        %v801 = vpack.c.bf16 %v770, %v767
        %v802 = vpack.c.bf16 %v778, %v775
        %v803 = vpack.c.bf16 %v786, %v783
        %v804 = vpack.c.bf16 %v794, %v791
        %v805 = vld [vmem:[#allocation8] sm:$0xf]
        %v806 = vld [vmem:[#allocation8 + $0x4] sm:$0xf]
        %v807 = vld [vmem:[#allocation8 + $0x8] sm:$0xf]
        %v808 = vld [vmem:[#allocation8 + $0xc] sm:$0xf]
        %v809 = vld [vmem:[#allocation8 + $0x10] sm:$0xf]
        %v810 = vld [vmem:[#allocation8 + $0x14] sm:$0xf]
        %v811 = vld [vmem:[#allocation8 + $0x18] sm:$0xf]
        %v812 = vld [vmem:[#allocation8 + $0x1c] sm:$0xf]
        %v813 = vld [vmem:[#allocation8 + $0x20] sm:$0xf]
        %v814 = vld [vmem:[#allocation8 + $0x24] sm:$0xf]
        %v815 = vld [vmem:[#allocation8 + $0x28] sm:$0xf]
        %v816 = vld [vmem:[#allocation8 + $0x2c] sm:$0xf]
        %v817 = vld [vmem:[#allocation8 + $0x30] sm:$0xf]
        %v818 = vld [vmem:[#allocation8 + $0x34] sm:$0xf]
        %v819 = vld [vmem:[#allocation8 + $0x38] sm:$0xf]
        %v820 = vld [vmem:[#allocation8 + $0x3c] sm:$0xf]
        %v821 = vld [vmem:[#allocation8 + $0x40] sm:$0xf]
        %v822 = vld [vmem:[#allocation8 + $0x44] sm:$0xf]
        %v823 = vld [vmem:[#allocation8 + $0x48] sm:$0xf]
        %v824 = vld [vmem:[#allocation8 + $0x4c] sm:$0xf]
        %v825 = vld [vmem:[#allocation8 + $0x50] sm:$0xf]
        %v826 = vld [vmem:[#allocation8 + $0x54] sm:$0xf]
        %v827 = vld [vmem:[#allocation8 + $0x58] sm:$0xf]
        %v828 = vld [vmem:[#allocation8 + $0x5c] sm:$0xf]
        %v829 = vld [vmem:[#allocation8 + $0x60] sm:$0xf]
        %v830 = vld [vmem:[#allocation8 + $0x64] sm:$0xf]
        %v831 = vld [vmem:[#allocation8 + $0x68] sm:$0xf]
        %v832 = vld [vmem:[#allocation8 + $0x6c] sm:$0xf]
        %v833 = vld [vmem:[#allocation8 + $0x70] sm:$0xf]
        %v834 = vld [vmem:[#allocation8 + $0x74] sm:$0xf]
        %v835 = vld [vmem:[#allocation8 + $0x78] sm:$0xf]
        %v836 = vld [vmem:[#allocation8 + $0x7c] sm:$0xf]
        %v837 = vld [vmem:[#allocation8 + $0x80] sm:$0xf]
        %v838 = vld [vmem:[#allocation8 + $0x84] sm:$0xf]
        %v839 = vld [vmem:[#allocation8 + $0x88] sm:$0xf]
        %v840 = vld [vmem:[#allocation8 + $0x8c] sm:$0xf]
        %v841 = vld [vmem:[#allocation8 + $0x90] sm:$0xf]
        %v842 = vld [vmem:[#allocation8 + $0x94] sm:$0xf]
        %v843 = vld [vmem:[#allocation8 + $0x98] sm:$0xf]
        %v844 = vld [vmem:[#allocation8 + $0x9c] sm:$0xf]
        %v845 = vld [vmem:[#allocation8 + $0xa0] sm:$0xf]
        %v846 = vld [vmem:[#allocation8 + $0xa4] sm:$0xf]
        %v847 = vld [vmem:[#allocation8 + $0xa8] sm:$0xf]
        %v848 = vld [vmem:[#allocation8 + $0xac] sm:$0xf]
        %v849 = vld [vmem:[#allocation8 + $0xb0] sm:$0xf]
        %v850 = vld [vmem:[#allocation8 + $0xb4] sm:$0xf]
        %v851 = vld [vmem:[#allocation8 + $0xb8] sm:$0xf]
        %v852 = vld [vmem:[#allocation8 + $0xbc] sm:$0xf]
        %v853 = vld [vmem:[%s5] sm:$0x1]
        %v855 = vlaneseq
        %v856 = vshrl.u32 %v855, 7
        %v857 = vsub.s32 0, %v856
        %v858 = vrot.slane %v853, %v857
        %v908 = vunpack.c.l.b16 %v805
        %v909 = vunpack.c.l.b16 %v806
        %v910 = vunpack.c.l.b16 %v807
        %v911 = vunpack.c.l.b16 %v808
        %v912 = vunpack.c.l.b16 %v809
        %v913 = vunpack.c.l.b16 %v810
        %v914 = vunpack.c.l.b16 %v811
        %v915 = vunpack.c.l.b16 %v812
        %v916 = vunpack.c.l.b16 %v813
        %v917 = vunpack.c.l.b16 %v814
        %v918 = vunpack.c.l.b16 %v815
        %v919 = vunpack.c.l.b16 %v816
        %v920 = vunpack.c.l.b16 %v817
        %v921 = vunpack.c.l.b16 %v818
        %v922 = vunpack.c.l.b16 %v819
        %v923 = vunpack.c.l.b16 %v820
        %v924 = vunpack.c.l.b16 %v821
        %v925 = vunpack.c.l.b16 %v822
        %v926 = vunpack.c.l.b16 %v823
        %v927 = vunpack.c.l.b16 %v824
        %v928 = vunpack.c.l.b16 %v825
        %v929 = vunpack.c.l.b16 %v826
        %v930 = vunpack.c.l.b16 %v827
        %v931 = vunpack.c.l.b16 %v828
        %v932 = vunpack.c.l.b16 %v829
        %v933 = vunpack.c.l.b16 %v830
        %v934 = vunpack.c.l.b16 %v831
        %v935 = vunpack.c.l.b16 %v832
        %v936 = vunpack.c.l.b16 %v833
        %v937 = vunpack.c.l.b16 %v834
        %v938 = vunpack.c.l.b16 %v835
        %v939 = vunpack.c.l.b16 %v836
        %v940 = vunpack.c.l.b16 %v837
        %v941 = vunpack.c.l.b16 %v838
        %v942 = vunpack.c.l.b16 %v839
        %v943 = vunpack.c.l.b16 %v840
        %v944 = vunpack.c.l.b16 %v841
        %v945 = vunpack.c.l.b16 %v842
        %v946 = vunpack.c.l.b16 %v843
        %v947 = vunpack.c.l.b16 %v844
        %v948 = vunpack.c.l.b16 %v845
        %v949 = vunpack.c.l.b16 %v846
        %v950 = vunpack.c.l.b16 %v847
        %v951 = vunpack.c.l.b16 %v848
        %v952 = vunpack.c.l.b16 %v849
        %v953 = vunpack.c.l.b16 %v850
        %v954 = vunpack.c.l.b16 %v851
        %v955 = vunpack.c.l.b16 %v852
        %v956 = vpack.c.b16 %v909, %v908
        %v957 = vpack.c.b16 %v911, %v910
        %v958 = vpack.c.b16 %v913, %v912
        %v959 = vpack.c.b16 %v915, %v914
        %v960 = vpack.c.b16 %v917, %v916
        %v961 = vpack.c.b16 %v919, %v918
        %v962 = vpack.c.b16 %v921, %v920
        %v963 = vpack.c.b16 %v923, %v922
        %v964 = vpack.c.b16 %v925, %v924
        %v965 = vpack.c.b16 %v927, %v926
        %v966 = vpack.c.b16 %v929, %v928
        %v967 = vpack.c.b16 %v931, %v930
        %v968 = vpack.c.b16 %v933, %v932
        %v969 = vpack.c.b16 %v935, %v934
        %v970 = vpack.c.b16 %v937, %v936
        %v971 = vpack.c.b16 %v939, %v938
        %v972 = vpack.c.b16 %v941, %v940
        %v973 = vpack.c.b16 %v943, %v942
        %v974 = vpack.c.b16 %v945, %v944
        %v975 = vpack.c.b16 %v947, %v946
        %v976 = vpack.c.b16 %v949, %v948
        %v977 = vpack.c.b16 %v951, %v950
        %v978 = vpack.c.b16 %v953, %v952
        %v979 = vpack.c.b16 %v955, %v954
        %1004 = vmatprep.subr.bf16.mxu0 0
        %1005 = vmatpush1.bf16.msra.mxu0 %v956
        %1006 = vmatprep.subr.bf16.mxu0 0
        %1007 = vmatpush1.bf16.msra.mxu0 %v957
        %1008 = vmatprep.subr.bf16.mxu0 0
        %1009 = vmatpush1.bf16.msra.mxu0 %v958
        %1010 = vmatprep.subr.bf16.mxu0 0
        %1011 = vmatpush1.bf16.msra.mxu0 %v959
        %1012 = vmatprep.subr.bf16.mxu0 0
        %1013 = vmatpush1.bf16.msra.mxu0 %v960
        %1014 = vmatprep.subr.bf16.mxu0 0
        %1015 = vmatpush1.bf16.msra.mxu0 %v961
        %1016 = vmatprep.subr.bf16.mxu0 0
        %1017 = vmatpush1.bf16.msra.mxu0 %v962
        %1018 = vmatprep.subr.bf16.mxu0 0
        %1019 = vmatpush1.bf16.msra.mxu0 %v963
        %1020 = vmatprep.subr.bf16.mxu0 0
        %1021 = vmatpush1.bf16.msra.mxu0 %v964
        %1022 = vmatprep.subr.bf16.mxu0 0
        %1023 = vmatpush1.bf16.msra.mxu0 %v965
        %1024 = vmatprep.subr.bf16.mxu0 0
        %1025 = vmatpush1.bf16.msra.mxu0 %v966
        %1026 = vmatprep.subr.bf16.mxu0 0
        %1027 = vmatpush1.bf16.msra.mxu0 %v967
        %1028 = vmatprep.subr.bf16.mxu0 0
        %1029 = vmatpush1.bf16.msra.mxu0 %v968
        %1030 = vmatprep.subr.bf16.mxu0 0
        %1031 = vmatpush1.bf16.msra.mxu0 %v969
        %1032 = vmatprep.subr.bf16.mxu0 0
        %1033 = vmatpush1.bf16.msra.mxu0 %v970
        %1034 = vmatprep.subr.bf16.mxu0 0
        %1035 = vmatpush1.bf16.msra.mxu0 %v971
        %1036 = vmatprep.mubr.bf16.mxu0 %v531
        %1037 = vmatmul.mubr.bf16.gmra.mrb[0].mxu0 %v644
        %v1038 = vpop.f32.mrb[0].mxu0
        %v1039 = vadd.f32 %v858, %v1038
        %v1040 = vpop.f32.mrb[0].mxu0
        %v1041 = vpop.f32.mrb[0].mxu0
        %v1042 = vadd.f32 %v858, %v1041
        %v1043 = vpop.f32.mrb[0].mxu0
        %1044 = vmatprep.mubr.bf16.mxu0 %v532
        %1045 = vmatmul.mubr.bf16.gmra.mrb[0].mxu0 %v645
        %v1046 = vpop.f32.mrb[0].mxu0
        %v1047 = vadd.f32 %v858, %v1046
        %v1048 = vpop.f32.mrb[0].mxu0
        %v1049 = vpop.f32.mrb[0].mxu0
        %v1050 = vadd.f32 %v858, %v1049
        %v1051 = vpop.f32.mrb[0].mxu0
        %1052 = vmatprep.mubr.bf16.mxu0 %v533
        %1053 = vmatmul.mubr.bf16.gmra.mrb[0].mxu0 %v646
        %v1054 = vpop.f32.mrb[0].mxu0
        %v1055 = vadd.f32 %v858, %v1054
        %v1056 = vpop.f32.mrb[0].mxu0
        %v1057 = vpop.f32.mrb[0].mxu0
        %v1058 = vadd.f32 %v858, %v1057
        %v1059 = vpop.f32.mrb[0].mxu0
        %1060 = vmatprep.mubr.bf16.mxu0 %v534
        %1061 = vmatmul.mubr.bf16.gmra.mrb[0].mxu0 %v647
        %v1062 = vpop.f32.mrb[0].mxu0
        %v1063 = vadd.f32 %v858, %v1062
        %v1064 = vpop.f32.mrb[0].mxu0
        %v1065 = vpop.f32.mrb[0].mxu0
        %v1066 = vadd.f32 %v858, %v1065
        %v1067 = vpop.f32.mrb[0].mxu0
        %1068 = vmatprep.mubr.bf16.mxu0 %v535
        %1069 = vmatmul.mubr.bf16.gmra.mrb[0].mxu0 %v648
        %v1070 = vpop.f32.mrb[0].mxu0
        %v1071 = vadd.f32 %v858, %v1070
        %v1072 = vpop.f32.mrb[0].mxu0
        %v1073 = vpop.f32.mrb[0].mxu0
        %v1074 = vadd.f32 %v858, %v1073
        %v1075 = vpop.f32.mrb[0].mxu0
        %1076 = vmatprep.mubr.bf16.mxu0 %v536
        %1077 = vmatmul.mubr.bf16.gmra.mrb[0].mxu0 %v649
        %v1078 = vpop.f32.mrb[0].mxu0
        %v1079 = vadd.f32 %v858, %v1078
        %v1080 = vpop.f32.mrb[0].mxu0
        %v1081 = vpop.f32.mrb[0].mxu0
        %v1082 = vadd.f32 %v858, %v1081
        %v1083 = vpop.f32.mrb[0].mxu0
        %1084 = vmatprep.mubr.bf16.mxu0 %v537
        %1085 = vmatmul.mubr.bf16.gmra.mrb[0].mxu0 %v650
        %v1086 = vpop.f32.mrb[0].mxu0
        %v1087 = vadd.f32 %v858, %v1086
        %v1088 = vpop.f32.mrb[0].mxu0
        %v1089 = vpop.f32.mrb[0].mxu0
        %v1090 = vadd.f32 %v858, %v1089
        %v1091 = vpop.f32.mrb[0].mxu0
        %1092 = vmatprep.mubr.bf16.mxu0 %v538
        %1093 = vmatmul.mubr.bf16.gmra.mrb[0].mxu0 %v651
        %v1094 = vpop.f32.mrb[0].mxu0
        %v1095 = vadd.f32 %v858, %v1094
        %v1096 = vpop.f32.mrb[0].mxu0
        %v1097 = vpop.f32.mrb[0].mxu0
        %v1098 = vadd.f32 %v858, %v1097
        %v1099 = vpop.f32.mrb[0].mxu0
        %1100 = vdwg.mxu0
        %1101 = vmatprep.subr.bf16.mxu0 0
        %1102 = vmatpush1.bf16.msra.mxu0 %v972
        %1103 = vmatprep.subr.bf16.mxu0 0
        %1104 = vmatpush1.bf16.msra.mxu0 %v973
        %1105 = vmatprep.subr.bf16.mxu0 0
        %1106 = vmatpush1.bf16.msra.mxu0 %v974
        %1107 = vmatprep.subr.bf16.mxu0 0
        %1108 = vmatpush1.bf16.msra.mxu0 %v975
        %1109 = vmatprep.subr.bf16.mxu0 0
        %1110 = vmatpush1.bf16.msra.mxu0 %v976
        %1111 = vmatprep.subr.bf16.mxu0 0
        %1112 = vmatpush1.bf16.msra.mxu0 %v977
        %1113 = vmatprep.subr.bf16.mxu0 0
        %1114 = vmatpush1.bf16.msra.mxu0 %v978
        %1115 = vmatprep.subr.bf16.mxu0 0
        %1116 = vmatpush1.bf16.msra.mxu0 %v979
        %1117 = vmatprep.subr.bf16.mxu0 0
        %1118 = vmatpush1.bf16.msra.mxu0 0
        %1119 = vmatprep.subr.bf16.mxu0 0
        %1120 = vmatpush1.bf16.msra.mxu0 0
        %1121 = vmatprep.subr.bf16.mxu0 0
        %1122 = vmatpush1.bf16.msra.mxu0 0
        %1123 = vmatprep.subr.bf16.mxu0 0
        %1124 = vmatpush1.bf16.msra.mxu0 0
        %1125 = vmatprep.subr.bf16.mxu0 0
        %1126 = vmatpush1.bf16.msra.mxu0 0
        %1127 = vmatprep.subr.bf16.mxu0 0
        %1128 = vmatpush1.bf16.msra.mxu0 0
        %1129 = vmatprep.subr.bf16.mxu0 0
        %1130 = vmatpush1.bf16.msra.mxu0 0
        %1131 = vmatprep.subr.bf16.mxu0 0
        %1132 = vmatpush1.bf16.msra.mxu0 0
        %1133 = vmatprep.mubr.bf16.mxu0 0
        %1134 = vmatmul.mubr.bf16.gmra.mrb[0].mxu0 %v797
        %v1135 = vpop.f32.mrb[0].mxu0
        %v1136 = vadd.f32 %v1039, %v1135
        %v1137 = vpop.f32.mrb[0].mxu0
        %v1138 = vpop.f32.mrb[0].mxu0
        %v1139 = vadd.f32 %v1042, %v1138
        %v1140 = vpop.f32.mrb[0].mxu0
        %1141 = vmatprep.mubr.bf16.mxu0 0
        %1142 = vmatmul.mubr.bf16.gmra.mrb[0].mxu0 %v798
        %v1143 = vpop.f32.mrb[0].mxu0
        %v1144 = vadd.f32 %v1047, %v1143
        %v1145 = vpop.f32.mrb[0].mxu0
        %v1146 = vpop.f32.mrb[0].mxu0
        %v1147 = vadd.f32 %v1050, %v1146
        %v1148 = vpop.f32.mrb[0].mxu0
        %1149 = vmatprep.mubr.bf16.mxu0 0
        %1150 = vmatmul.mubr.bf16.gmra.mrb[0].mxu0 %v799
        %v1151 = vpop.f32.mrb[0].mxu0
        %v1152 = vadd.f32 %v1055, %v1151
        %v1153 = vpop.f32.mrb[0].mxu0
        %v1154 = vpop.f32.mrb[0].mxu0
        %v1155 = vadd.f32 %v1058, %v1154
        %v1156 = vpop.f32.mrb[0].mxu0
        %1157 = vmatprep.mubr.bf16.mxu0 0
        %1158 = vmatmul.mubr.bf16.gmra.mrb[0].mxu0 %v800
        %v1159 = vpop.f32.mrb[0].mxu0
        %v1160 = vadd.f32 %v1063, %v1159
        %v1161 = vpop.f32.mrb[0].mxu0
        %v1162 = vpop.f32.mrb[0].mxu0
        %v1163 = vadd.f32 %v1066, %v1162
        %v1164 = vpop.f32.mrb[0].mxu0
        %1165 = vmatprep.mubr.bf16.mxu0 0
        %1166 = vmatmul.mubr.bf16.gmra.mrb[0].mxu0 %v801
        %v1167 = vpop.f32.mrb[0].mxu0
        %v1168 = vadd.f32 %v1071, %v1167
        %v1169 = vpop.f32.mrb[0].mxu0
        %v1170 = vpop.f32.mrb[0].mxu0
        %v1171 = vadd.f32 %v1074, %v1170
        %v1172 = vpop.f32.mrb[0].mxu0
        %1173 = vmatprep.mubr.bf16.mxu0 0
        %1174 = vmatmul.mubr.bf16.gmra.mrb[0].mxu0 %v802
        %v1175 = vpop.f32.mrb[0].mxu0
        %v1176 = vadd.f32 %v1079, %v1175
        %v1177 = vpop.f32.mrb[0].mxu0
        %v1178 = vpop.f32.mrb[0].mxu0
        %v1179 = vadd.f32 %v1082, %v1178
        %v1180 = vpop.f32.mrb[0].mxu0
        %1181 = vmatprep.mubr.bf16.mxu0 0
        %1182 = vmatmul.mubr.bf16.gmra.mrb[0].mxu0 %v803
        %v1183 = vpop.f32.mrb[0].mxu0
        %v1184 = vadd.f32 %v1087, %v1183
        %v1185 = vpop.f32.mrb[0].mxu0
        %v1186 = vpop.f32.mrb[0].mxu0
        %v1187 = vadd.f32 %v1090, %v1186
        %v1188 = vpop.f32.mrb[0].mxu0
        %1189 = vmatprep.mubr.bf16.mxu0 0
        %1190 = vmatmul.mubr.bf16.gmra.mrb[0].mxu0 %v804
        %v1191 = vpop.f32.mrb[0].mxu0
        %v1192 = vadd.f32 %v1095, %v1191
        %v1193 = vpop.f32.mrb[0].mxu0
        %v1194 = vpop.f32.mrb[0].mxu0
        %v1195 = vadd.f32 %v1098, %v1194
        %v1196 = vpop.f32.mrb[0].mxu0
        %1197 = vdwg.mxu0
        %v1198 = vmax.f32 %v1136, 0.0
        %v1199 = vmax.f32 %v1139, 0.0
        %v1200 = vmax.f32 %v1144, 0.0
        %v1201 = vmax.f32 %v1147, 0.0
        %v1202 = vmax.f32 %v1152, 0.0
        %v1203 = vmax.f32 %v1155, 0.0
        %v1204 = vmax.f32 %v1160, 0.0
        %v1205 = vmax.f32 %v1163, 0.0
        %v1206 = vmax.f32 %v1168, 0.0
        %v1207 = vmax.f32 %v1171, 0.0
        %v1208 = vmax.f32 %v1176, 0.0
        %v1209 = vmax.f32 %v1179, 0.0
        %v1210 = vmax.f32 %v1184, 0.0
        %v1211 = vmax.f32 %v1187, 0.0
        %v1212 = vmax.f32 %v1192, 0.0
        %v1213 = vmax.f32 %v1195, 0.0
        %v1214 = vpack.c.bf16 %v1199, %v1198
        %v1215 = vpack.c.bf16 %v1201, %v1200
        %v1216 = vpack.c.bf16 %v1203, %v1202
        %v1217 = vpack.c.bf16 %v1205, %v1204
        %v1218 = vpack.c.bf16 %v1207, %v1206
        %v1219 = vpack.c.bf16 %v1209, %v1208
        %v1220 = vpack.c.bf16 %v1211, %v1210
        %v1221 = vpack.c.bf16 %v1213, %v1212
        %1222 = vmatprep.subr.bf16.mxu0 0
        %1223 = vmatpush1.bf16.msra.mxu0 %v1214
        %1224 = vmatprep.subr.bf16.mxu0 0
        %1225 = vmatpush1.bf16.msra.mxu0 %v1215
        %1226 = vmatprep.subr.bf16.mxu0 0
        %1227 = vmatpush1.bf16.msra.mxu0 %v1216
        %1228 = vmatprep.subr.bf16.mxu0 0
        %1229 = vmatpush1.bf16.msra.mxu0 %v1217
        %1230 = vmatprep.subr.bf16.mxu0 0
        %1231 = vmatpush1.bf16.msra.mxu0 %v1218
        %1232 = vmatprep.subr.bf16.mxu0 0
        %1233 = vmatpush1.bf16.msra.mxu0 %v1219
        %1234 = vmatprep.subr.bf16.mxu0 0
        %1235 = vmatpush1.bf16.msra.mxu0 %v1220
        %1236 = vmatprep.subr.bf16.mxu0 0
        %1237 = vmatpush1.bf16.msra.mxu0 %v1221
        %1238 = vmatprep.subr.bf16.mxu0 0
        %1239 = vmatpush1.bf16.msra.mxu0 0
        %1240 = vmatprep.subr.bf16.mxu0 0
        %1241 = vmatpush1.bf16.msra.mxu0 0
        %1242 = vmatprep.subr.bf16.mxu0 0
        %1243 = vmatpush1.bf16.msra.mxu0 0
        %1244 = vmatprep.subr.bf16.mxu0 0
        %1245 = vmatpush1.bf16.msra.mxu0 0
        %1246 = vmatprep.subr.bf16.mxu0 0
        %1247 = vmatpush1.bf16.msra.mxu0 0
        %1248 = vmatprep.subr.bf16.mxu0 0
        %1249 = vmatpush1.bf16.msra.mxu0 0
        %1250 = vmatprep.subr.bf16.mxu0 0
        %1251 = vmatpush1.bf16.msra.mxu0 0
        %1252 = vmatprep.subr.bf16.mxu0 0
        %1253 = vmatpush1.bf16.msra.mxu0 0
        %1254 = vmatprep.mubr.bf16.mxu0 0
        %1255 = vmatmul.mubr.bf16.gmra.mrb[0].mxu0 %v483
        %v1256 = vpop.f32.mrb[0].mxu0
        %v1257 = vadd.f32 0.0, %v1256
        %v1258 = vpop.f32.mrb[0].mxu0
        %v1259 = vpop.f32.mrb[0].mxu0
        %v1260 = vadd.f32 0.0, %v1259
        %v1261 = vpop.f32.mrb[0].mxu0
        %1262 = vmatprep.mubr.bf16.mxu0 0
        %1263 = vmatmul.mubr.bf16.gmra.mrb[0].mxu0 %v484
        %v1264 = vpop.f32.mrb[0].mxu0
        %v1265 = vadd.f32 0.0, %v1264
        %v1266 = vpop.f32.mrb[0].mxu0
        %v1267 = vpop.f32.mrb[0].mxu0
        %v1268 = vadd.f32 0.0, %v1267
        %v1269 = vpop.f32.mrb[0].mxu0
        %1270 = vmatprep.mubr.bf16.mxu0 0
        %1271 = vmatmul.mubr.bf16.gmra.mrb[0].mxu0 %v485
        %v1272 = vpop.f32.mrb[0].mxu0
        %v1273 = vadd.f32 0.0, %v1272
        %v1274 = vpop.f32.mrb[0].mxu0
        %v1275 = vpop.f32.mrb[0].mxu0
        %v1276 = vadd.f32 0.0, %v1275
        %v1277 = vpop.f32.mrb[0].mxu0
        %1278 = vmatprep.mubr.bf16.mxu0 0
        %1279 = vmatmul.mubr.bf16.gmra.mrb[0].mxu0 %v486
        %v1280 = vpop.f32.mrb[0].mxu0
        %v1281 = vadd.f32 0.0, %v1280
        %v1282 = vpop.f32.mrb[0].mxu0
        %v1283 = vpop.f32.mrb[0].mxu0
        %v1284 = vadd.f32 0.0, %v1283
        %v1285 = vpop.f32.mrb[0].mxu0
        %1286 = vmatprep.mubr.bf16.mxu0 0
        %1287 = vmatmul.mubr.bf16.gmra.mrb[0].mxu0 %v487
        %v1288 = vpop.f32.mrb[0].mxu0
        %v1289 = vadd.f32 0.0, %v1288
        %v1290 = vpop.f32.mrb[0].mxu0
        %v1291 = vpop.f32.mrb[0].mxu0
        %v1292 = vadd.f32 0.0, %v1291
        %v1293 = vpop.f32.mrb[0].mxu0
        %1294 = vmatprep.mubr.bf16.mxu0 0
        %1295 = vmatmul.mubr.bf16.gmra.mrb[0].mxu0 %v488
        %v1296 = vpop.f32.mrb[0].mxu0
        %v1297 = vadd.f32 0.0, %v1296
        %v1298 = vpop.f32.mrb[0].mxu0
        %v1299 = vpop.f32.mrb[0].mxu0
        %v1300 = vadd.f32 0.0, %v1299
        %v1301 = vpop.f32.mrb[0].mxu0
        %1302 = vmatprep.mubr.bf16.mxu0 0
        %1303 = vmatmul.mubr.bf16.gmra.mrb[0].mxu0 %v489
        %v1304 = vpop.f32.mrb[0].mxu0
        %v1305 = vadd.f32 0.0, %v1304
        %v1306 = vpop.f32.mrb[0].mxu0
        %v1307 = vpop.f32.mrb[0].mxu0
        %v1308 = vadd.f32 0.0, %v1307
        %v1309 = vpop.f32.mrb[0].mxu0
        %1310 = vmatprep.mubr.bf16.mxu0 0
        %1311 = vmatmul.mubr.bf16.gmra.mrb[0].mxu0 %v490
        %v1312 = vpop.f32.mrb[0].mxu0
        %v1313 = vadd.f32 0.0, %v1312
        %v1314 = vpop.f32.mrb[0].mxu0
        %v1315 = vpop.f32.mrb[0].mxu0
        %v1316 = vadd.f32 0.0, %v1315
        %v1317 = vpop.f32.mrb[0].mxu0
        %1318 = vdwg.mxu0
        %v1319 = vpack.c.bf16 %v1260, %v1257
        %v1320 = vpack.c.bf16 %v1268, %v1265
        %v1321 = vpack.c.bf16 %v1276, %v1273
        %v1322 = vpack.c.bf16 %v1284, %v1281
        %v1323 = vpack.c.bf16 %v1292, %v1289
        %v1324 = vpack.c.bf16 %v1300, %v1297
        %v1325 = vpack.c.bf16 %v1308, %v1305
        %v1326 = vpack.c.bf16 %v1316, %v1313
        %1327 = vmatprep.subr.bf16.mxu0 0
        %1328 = vmatpush1.bf16.msra.mxu0 %v1214
        %1329 = vmatprep.subr.bf16.mxu0 0
        %1330 = vmatpush1.bf16.msra.mxu0 %v1215
        %1331 = vmatprep.subr.bf16.mxu0 0
        %1332 = vmatpush1.bf16.msra.mxu0 %v1216
        %1333 = vmatprep.subr.bf16.mxu0 0
        %1334 = vmatpush1.bf16.msra.mxu0 %v1217
        %1335 = vmatprep.subr.bf16.mxu0 0
        %1336 = vmatpush1.bf16.msra.mxu0 %v1218
        %1337 = vmatprep.subr.bf16.mxu0 0
        %1338 = vmatpush1.bf16.msra.mxu0 %v1219
        %1339 = vmatprep.subr.bf16.mxu0 0
        %1340 = vmatpush1.bf16.msra.mxu0 %v1220
        %1341 = vmatprep.subr.bf16.mxu0 0
        %1342 = vmatpush1.bf16.msra.mxu0 %v1221
        %1343 = vmatprep.subr.bf16.mxu0 0
        %1344 = vmatpush1.bf16.msra.mxu0 0
        %1345 = vmatprep.subr.bf16.mxu0 0
        %1346 = vmatpush1.bf16.msra.mxu0 0
        %1347 = vmatprep.subr.bf16.mxu0 0
        %1348 = vmatpush1.bf16.msra.mxu0 0
        %1349 = vmatprep.subr.bf16.mxu0 0
        %1350 = vmatpush1.bf16.msra.mxu0 0
        %1351 = vmatprep.subr.bf16.mxu0 0
        %1352 = vmatpush1.bf16.msra.mxu0 0
        %1353 = vmatprep.subr.bf16.mxu0 0
        %1354 = vmatpush1.bf16.msra.mxu0 0
        %1355 = vmatprep.subr.bf16.mxu0 0
        %1356 = vmatpush1.bf16.msra.mxu0 0
        %1357 = vmatprep.subr.bf16.mxu0 0
        %1358 = vmatpush1.bf16.msra.mxu0 0
        %1359 = vmatprep.mubr.bf16.mxu0 0
        %1360 = vmatmul.mubr.bf16.gmra.mrb[0].mxu0 %v684
        %v1361 = vpop.f32.mrb[0].mxu0
        %v1362 = vadd.f32 0.0, %v1361
        %v1363 = vpop.f32.mrb[0].mxu0
        %v1364 = vpop.f32.mrb[0].mxu0
        %v1365 = vadd.f32 0.0, %v1364
        %v1366 = vpop.f32.mrb[0].mxu0
        %1367 = vmatprep.mubr.bf16.mxu0 0
        %1368 = vmatmul.mubr.bf16.gmra.mrb[0].mxu0 %v685
        %v1369 = vpop.f32.mrb[0].mxu0
        %v1370 = vadd.f32 0.0, %v1369
        %v1371 = vpop.f32.mrb[0].mxu0
        %v1372 = vpop.f32.mrb[0].mxu0
        %v1373 = vadd.f32 0.0, %v1372
        %v1374 = vpop.f32.mrb[0].mxu0
        %1375 = vmatprep.mubr.bf16.mxu0 0
        %1376 = vmatmul.mubr.bf16.gmra.mrb[0].mxu0 %v686
        %v1377 = vpop.f32.mrb[0].mxu0
        %v1378 = vadd.f32 0.0, %v1377
        %v1379 = vpop.f32.mrb[0].mxu0
        %v1380 = vpop.f32.mrb[0].mxu0
        %v1381 = vadd.f32 0.0, %v1380
        %v1382 = vpop.f32.mrb[0].mxu0
        %1383 = vmatprep.mubr.bf16.mxu0 0
        %1384 = vmatmul.mubr.bf16.gmra.mrb[0].mxu0 %v687
        %v1385 = vpop.f32.mrb[0].mxu0
        %v1386 = vadd.f32 0.0, %v1385
        %v1387 = vpop.f32.mrb[0].mxu0
        %v1388 = vpop.f32.mrb[0].mxu0
        %v1389 = vadd.f32 0.0, %v1388
        %v1390 = vpop.f32.mrb[0].mxu0
        %1391 = vmatprep.mubr.bf16.mxu0 0
        %1392 = vmatmul.mubr.bf16.gmra.mrb[0].mxu0 %v688
        %v1393 = vpop.f32.mrb[0].mxu0
        %v1394 = vadd.f32 0.0, %v1393
        %v1395 = vpop.f32.mrb[0].mxu0
        %v1396 = vpop.f32.mrb[0].mxu0
        %v1397 = vadd.f32 0.0, %v1396
        %v1398 = vpop.f32.mrb[0].mxu0
        %1399 = vmatprep.mubr.bf16.mxu0 0
        %1400 = vmatmul.mubr.bf16.gmra.mrb[0].mxu0 %v689
        %v1401 = vpop.f32.mrb[0].mxu0
        %v1402 = vadd.f32 0.0, %v1401
        %v1403 = vpop.f32.mrb[0].mxu0
        %v1404 = vpop.f32.mrb[0].mxu0
        %v1405 = vadd.f32 0.0, %v1404
        %v1406 = vpop.f32.mrb[0].mxu0
        %1407 = vmatprep.mubr.bf16.mxu0 0
        %1408 = vmatmul.mubr.bf16.gmra.mrb[0].mxu0 %v690
        %v1409 = vpop.f32.mrb[0].mxu0
        %v1410 = vadd.f32 0.0, %v1409
        %v1411 = vpop.f32.mrb[0].mxu0
        %v1412 = vpop.f32.mrb[0].mxu0
        %v1413 = vadd.f32 0.0, %v1412
        %v1414 = vpop.f32.mrb[0].mxu0
        %1415 = vmatprep.mubr.bf16.mxu0 0
        %1416 = vmatmul.mubr.bf16.gmra.mrb[0].mxu0 %v691
        %v1417 = vpop.f32.mrb[0].mxu0
        %v1418 = vadd.f32 0.0, %v1417
        %v1419 = vpop.f32.mrb[0].mxu0
        %v1420 = vpop.f32.mrb[0].mxu0
        %v1421 = vadd.f32 0.0, %v1420
        %v1422 = vpop.f32.mrb[0].mxu0
        %1423 = vdwg.mxu0
        %v1424 = vpack.c.bf16 %v1365, %v1362
        %v1425 = vpack.c.bf16 %v1373, %v1370
        %v1426 = vpack.c.bf16 %v1381, %v1378
        %v1427 = vpack.c.bf16 %v1389, %v1386
        %v1428 = vpack.c.bf16 %v1397, %v1394
        %v1429 = vpack.c.bf16 %v1405, %v1402
        %v1430 = vpack.c.bf16 %v1413, %v1410
        %v1431 = vpack.c.bf16 %v1421, %v1418
        %v1432 = vld [vmem:[#allocation10] sm:$0xf]
        %v1433 = vld [vmem:[#allocation10 + $0x4] sm:$0xf]
        %v1434 = vld [vmem:[#allocation10 + $0x8] sm:$0xf]
        %v1435 = vld [vmem:[#allocation10 + $0xc] sm:$0xf]
        %v1436 = vld [vmem:[#allocation10 + $0x10] sm:$0xf]
        %v1437 = vld [vmem:[#allocation10 + $0x14] sm:$0xf]
        %v1438 = vld [vmem:[#allocation10 + $0x18] sm:$0xf]
        %v1439 = vld [vmem:[#allocation10 + $0x1c] sm:$0xf]
        %v1440 = vld [vmem:[#allocation10 + $0x20] sm:$0xf]
        %v1441 = vld [vmem:[#allocation10 + $0x24] sm:$0xf]
        %v1442 = vld [vmem:[#allocation10 + $0x28] sm:$0xf]
        %v1443 = vld [vmem:[#allocation10 + $0x2c] sm:$0xf]
        %v1444 = vld [vmem:[#allocation10 + $0x30] sm:$0xf]
        %v1445 = vld [vmem:[#allocation10 + $0x34] sm:$0xf]
        %v1446 = vld [vmem:[#allocation10 + $0x38] sm:$0xf]
        %v1447 = vld [vmem:[#allocation10 + $0x3c] sm:$0xf]
        %v1448 = vld [vmem:[#allocation10 + $0x40] sm:$0xf]
        %v1449 = vld [vmem:[#allocation10 + $0x44] sm:$0xf]
        %v1450 = vld [vmem:[#allocation10 + $0x48] sm:$0xf]
        %v1451 = vld [vmem:[#allocation10 + $0x4c] sm:$0xf]
        %v1452 = vld [vmem:[#allocation10 + $0x50] sm:$0xf]
        %v1453 = vld [vmem:[#allocation10 + $0x54] sm:$0xf]
        %v1454 = vld [vmem:[#allocation10 + $0x58] sm:$0xf]
        %v1455 = vld [vmem:[#allocation10 + $0x5c] sm:$0xf]
        %v1456 = vld [vmem:[#allocation10 + $0x60] sm:$0xf]
        %v1457 = vld [vmem:[#allocation10 + $0x64] sm:$0xf]
        %v1458 = vld [vmem:[#allocation10 + $0x68] sm:$0xf]
        %v1459 = vld [vmem:[#allocation10 + $0x6c] sm:$0xf]
        %v1460 = vld [vmem:[#allocation10 + $0x70] sm:$0xf]
        %v1461 = vld [vmem:[#allocation10 + $0x74] sm:$0xf]
        %v1462 = vld [vmem:[#allocation10 + $0x78] sm:$0xf]
        %v1463 = vld [vmem:[#allocation10 + $0x7c] sm:$0xf]
        %v1464 = vld [vmem:[#allocation10 + $0x80] sm:$0xf]
        %v1465 = vld [vmem:[#allocation10 + $0x84] sm:$0xf]
        %v1466 = vld [vmem:[#allocation10 + $0x88] sm:$0xf]
        %v1467 = vld [vmem:[#allocation10 + $0x8c] sm:$0xf]
        %v1468 = vld [vmem:[#allocation10 + $0x90] sm:$0xf]
        %v1469 = vld [vmem:[#allocation10 + $0x94] sm:$0xf]
        %v1470 = vld [vmem:[#allocation10 + $0x98] sm:$0xf]
        %v1471 = vld [vmem:[#allocation10 + $0x9c] sm:$0xf]
        %v1472 = vld [vmem:[#allocation10 + $0xa0] sm:$0xf]
        %v1473 = vld [vmem:[#allocation10 + $0xa4] sm:$0xf]
        %v1474 = vld [vmem:[#allocation10 + $0xa8] sm:$0xf]
        %v1475 = vld [vmem:[#allocation10 + $0xac] sm:$0xf]
        %v1476 = vld [vmem:[#allocation10 + $0xb0] sm:$0xf]
        %v1477 = vld [vmem:[#allocation10 + $0xb4] sm:$0xf]
        %v1478 = vld [vmem:[#allocation10 + $0xb8] sm:$0xf]
        %v1479 = vld [vmem:[#allocation10 + $0xbc] sm:$0xf]
        %v1480 = vld [vmem:[%s7] sm:$0x1]
        %v1482 = vlaneseq
        %v1483 = vshrl.u32 %v1482, 7
        %v1484 = vsub.s32 0, %v1483
        %v1485 = vrot.slane %v1480, %v1484
        %v1535 = vunpack.c.l.b16 %v1432
        %v1536 = vunpack.c.l.b16 %v1433
        %v1537 = vunpack.c.l.b16 %v1434
        %v1538 = vunpack.c.l.b16 %v1435
        %v1539 = vunpack.c.l.b16 %v1436
        %v1540 = vunpack.c.l.b16 %v1437
        %v1541 = vunpack.c.l.b16 %v1438
        %v1542 = vunpack.c.l.b16 %v1439
        %v1543 = vunpack.c.l.b16 %v1440
        %v1544 = vunpack.c.l.b16 %v1441
        %v1545 = vunpack.c.l.b16 %v1442
        %v1546 = vunpack.c.l.b16 %v1443
        %v1547 = vunpack.c.l.b16 %v1444
        %v1548 = vunpack.c.l.b16 %v1445
        %v1549 = vunpack.c.l.b16 %v1446
        %v1550 = vunpack.c.l.b16 %v1447
        %v1551 = vunpack.c.l.b16 %v1448
        %v1552 = vunpack.c.l.b16 %v1449
        %v1553 = vunpack.c.l.b16 %v1450
        %v1554 = vunpack.c.l.b16 %v1451
        %v1555 = vunpack.c.l.b16 %v1452
        %v1556 = vunpack.c.l.b16 %v1453
        %v1557 = vunpack.c.l.b16 %v1454
        %v1558 = vunpack.c.l.b16 %v1455
        %v1559 = vunpack.c.l.b16 %v1456
        %v1560 = vunpack.c.l.b16 %v1457
        %v1561 = vunpack.c.l.b16 %v1458
        %v1562 = vunpack.c.l.b16 %v1459
        %v1563 = vunpack.c.l.b16 %v1460
        %v1564 = vunpack.c.l.b16 %v1461
        %v1565 = vunpack.c.l.b16 %v1462
        %v1566 = vunpack.c.l.b16 %v1463
        %v1567 = vunpack.c.l.b16 %v1464
        %v1568 = vunpack.c.l.b16 %v1465
        %v1569 = vunpack.c.l.b16 %v1466
        %v1570 = vunpack.c.l.b16 %v1467
        %v1571 = vunpack.c.l.b16 %v1468
        %v1572 = vunpack.c.l.b16 %v1469
        %v1573 = vunpack.c.l.b16 %v1470
        %v1574 = vunpack.c.l.b16 %v1471
        %v1575 = vunpack.c.l.b16 %v1472
        %v1576 = vunpack.c.l.b16 %v1473
        %v1577 = vunpack.c.l.b16 %v1474
        %v1578 = vunpack.c.l.b16 %v1475
        %v1579 = vunpack.c.l.b16 %v1476
        %v1580 = vunpack.c.l.b16 %v1477
        %v1581 = vunpack.c.l.b16 %v1478
        %v1582 = vunpack.c.l.b16 %v1479
        %v1583 = vpack.c.b16 %v1536, %v1535
        %v1584 = vpack.c.b16 %v1538, %v1537
        %v1585 = vpack.c.b16 %v1540, %v1539
        %v1586 = vpack.c.b16 %v1542, %v1541
        %v1587 = vpack.c.b16 %v1544, %v1543
        %v1588 = vpack.c.b16 %v1546, %v1545
        %v1589 = vpack.c.b16 %v1548, %v1547
        %v1590 = vpack.c.b16 %v1550, %v1549
        %v1591 = vpack.c.b16 %v1552, %v1551
        %v1592 = vpack.c.b16 %v1554, %v1553
        %v1593 = vpack.c.b16 %v1556, %v1555
        %v1594 = vpack.c.b16 %v1558, %v1557
        %v1595 = vpack.c.b16 %v1560, %v1559
        %v1596 = vpack.c.b16 %v1562, %v1561
        %v1597 = vpack.c.b16 %v1564, %v1563
        %v1598 = vpack.c.b16 %v1566, %v1565
        %v1599 = vpack.c.b16 %v1568, %v1567
        %v1600 = vpack.c.b16 %v1570, %v1569
        %v1601 = vpack.c.b16 %v1572, %v1571
        %v1602 = vpack.c.b16 %v1574, %v1573
        %v1603 = vpack.c.b16 %v1576, %v1575
        %v1604 = vpack.c.b16 %v1578, %v1577
        %v1605 = vpack.c.b16 %v1580, %v1579
        %v1606 = vpack.c.b16 %v1582, %v1581
        %1631 = vmatprep.subr.bf16.mxu0 0
        %1632 = vmatpush1.bf16.msra.mxu0 %v1583
        %1633 = vmatprep.subr.bf16.mxu0 0
        %1634 = vmatpush1.bf16.msra.mxu0 %v1584
        %1635 = vmatprep.subr.bf16.mxu0 0
        %1636 = vmatpush1.bf16.msra.mxu0 %v1585
        %1637 = vmatprep.subr.bf16.mxu0 0
        %1638 = vmatpush1.bf16.msra.mxu0 %v1586
        %1639 = vmatprep.subr.bf16.mxu0 0
        %1640 = vmatpush1.bf16.msra.mxu0 %v1587
        %1641 = vmatprep.subr.bf16.mxu0 0
        %1642 = vmatpush1.bf16.msra.mxu0 %v1588
        %1643 = vmatprep.subr.bf16.mxu0 0
        %1644 = vmatpush1.bf16.msra.mxu0 %v1589
        %1645 = vmatprep.subr.bf16.mxu0 0
        %1646 = vmatpush1.bf16.msra.mxu0 %v1590
        %1647 = vmatprep.subr.bf16.mxu0 0
        %1648 = vmatpush1.bf16.msra.mxu0 %v1591
        %1649 = vmatprep.subr.bf16.mxu0 0
        %1650 = vmatpush1.bf16.msra.mxu0 %v1592
        %1651 = vmatprep.subr.bf16.mxu0 0
        %1652 = vmatpush1.bf16.msra.mxu0 %v1593
        %1653 = vmatprep.subr.bf16.mxu0 0
        %1654 = vmatpush1.bf16.msra.mxu0 %v1594
        %1655 = vmatprep.subr.bf16.mxu0 0
        %1656 = vmatpush1.bf16.msra.mxu0 %v1595
        %1657 = vmatprep.subr.bf16.mxu0 0
        %1658 = vmatpush1.bf16.msra.mxu0 %v1596
        %1659 = vmatprep.subr.bf16.mxu0 0
        %1660 = vmatpush1.bf16.msra.mxu0 %v1597
        %1661 = vmatprep.subr.bf16.mxu0 0
        %1662 = vmatpush1.bf16.msra.mxu0 %v1598
        %1663 = vmatprep.mubr.bf16.mxu0 %v1214
        %1664 = vmatmul.mubr.bf16.gmra.mrb[0].mxu0 %v1319
        %v1665 = vpop.f32.mrb[0].mxu0
        %v1666 = vadd.f32 %v1485, %v1665
        %v1667 = vpop.f32.mrb[0].mxu0
        %v1668 = vpop.f32.mrb[0].mxu0
        %v1669 = vadd.f32 %v1485, %v1668
        %v1670 = vpop.f32.mrb[0].mxu0
        %1671 = vmatprep.mubr.bf16.mxu0 %v1215
        %1672 = vmatmul.mubr.bf16.gmra.mrb[0].mxu0 %v1320
        %v1673 = vpop.f32.mrb[0].mxu0
        %v1674 = vadd.f32 %v1485, %v1673
        %v1675 = vpop.f32.mrb[0].mxu0
        %v1676 = vpop.f32.mrb[0].mxu0
        %v1677 = vadd.f32 %v1485, %v1676
        %v1678 = vpop.f32.mrb[0].mxu0
        %1679 = vmatprep.mubr.bf16.mxu0 %v1216
        %1680 = vmatmul.mubr.bf16.gmra.mrb[0].mxu0 %v1321
        %v1681 = vpop.f32.mrb[0].mxu0
        %v1682 = vadd.f32 %v1485, %v1681
        %v1683 = vpop.f32.mrb[0].mxu0
        %v1684 = vpop.f32.mrb[0].mxu0
        %v1685 = vadd.f32 %v1485, %v1684
        %v1686 = vpop.f32.mrb[0].mxu0
        %1687 = vmatprep.mubr.bf16.mxu0 %v1217
        %1688 = vmatmul.mubr.bf16.gmra.mrb[0].mxu0 %v1322
        %v1689 = vpop.f32.mrb[0].mxu0
        %v1690 = vadd.f32 %v1485, %v1689
        %v1691 = vpop.f32.mrb[0].mxu0
        %v1692 = vpop.f32.mrb[0].mxu0
        %v1693 = vadd.f32 %v1485, %v1692
        %v1694 = vpop.f32.mrb[0].mxu0
        %1695 = vmatprep.mubr.bf16.mxu0 %v1218
        %1696 = vmatmul.mubr.bf16.gmra.mrb[0].mxu0 %v1323
        %v1697 = vpop.f32.mrb[0].mxu0
        %v1698 = vadd.f32 %v1485, %v1697
        %v1699 = vpop.f32.mrb[0].mxu0
        %v1700 = vpop.f32.mrb[0].mxu0
        %v1701 = vadd.f32 %v1485, %v1700
        %v1702 = vpop.f32.mrb[0].mxu0
        %1703 = vmatprep.mubr.bf16.mxu0 %v1219
        %1704 = vmatmul.mubr.bf16.gmra.mrb[0].mxu0 %v1324
        %v1705 = vpop.f32.mrb[0].mxu0
        %v1706 = vadd.f32 %v1485, %v1705
        %v1707 = vpop.f32.mrb[0].mxu0
        %v1708 = vpop.f32.mrb[0].mxu0
        %v1709 = vadd.f32 %v1485, %v1708
        %v1710 = vpop.f32.mrb[0].mxu0
        %1711 = vmatprep.mubr.bf16.mxu0 %v1220
        %1712 = vmatmul.mubr.bf16.gmra.mrb[0].mxu0 %v1325
        %v1713 = vpop.f32.mrb[0].mxu0
        %v1714 = vadd.f32 %v1485, %v1713
        %v1715 = vpop.f32.mrb[0].mxu0
        %v1716 = vpop.f32.mrb[0].mxu0
        %v1717 = vadd.f32 %v1485, %v1716
        %v1718 = vpop.f32.mrb[0].mxu0
        %1719 = vmatprep.mubr.bf16.mxu0 %v1221
        %1720 = vmatmul.mubr.bf16.gmra.mrb[0].mxu0 %v1326
        %v1721 = vpop.f32.mrb[0].mxu0
        %v1722 = vadd.f32 %v1485, %v1721
        %v1723 = vpop.f32.mrb[0].mxu0
        %v1724 = vpop.f32.mrb[0].mxu0
        %v1725 = vadd.f32 %v1485, %v1724
        %v1726 = vpop.f32.mrb[0].mxu0
        %1727 = vdwg.mxu0
        %1728 = vmatprep.subr.bf16.mxu0 0
        %1729 = vmatpush1.bf16.msra.mxu0 %v1599
        %1730 = vmatprep.subr.bf16.mxu0 0
        %1731 = vmatpush1.bf16.msra.mxu0 %v1600
        %1732 = vmatprep.subr.bf16.mxu0 0
        %1733 = vmatpush1.bf16.msra.mxu0 %v1601
        %1734 = vmatprep.subr.bf16.mxu0 0
        %1735 = vmatpush1.bf16.msra.mxu0 %v1602
        %1736 = vmatprep.subr.bf16.mxu0 0
        %1737 = vmatpush1.bf16.msra.mxu0 %v1603
        %1738 = vmatprep.subr.bf16.mxu0 0
        %1739 = vmatpush1.bf16.msra.mxu0 %v1604
        %1740 = vmatprep.subr.bf16.mxu0 0
        %1741 = vmatpush1.bf16.msra.mxu0 %v1605
        %1742 = vmatprep.subr.bf16.mxu0 0
        %1743 = vmatpush1.bf16.msra.mxu0 %v1606
        %1744 = vmatprep.subr.bf16.mxu0 0
        %1745 = vmatpush1.bf16.msra.mxu0 0
        %1746 = vmatprep.subr.bf16.mxu0 0
        %1747 = vmatpush1.bf16.msra.mxu0 0
        %1748 = vmatprep.subr.bf16.mxu0 0
        %1749 = vmatpush1.bf16.msra.mxu0 0
        %1750 = vmatprep.subr.bf16.mxu0 0
        %1751 = vmatpush1.bf16.msra.mxu0 0
        %1752 = vmatprep.subr.bf16.mxu0 0
        %1753 = vmatpush1.bf16.msra.mxu0 0
        %1754 = vmatprep.subr.bf16.mxu0 0
        %1755 = vmatpush1.bf16.msra.mxu0 0
        %1756 = vmatprep.subr.bf16.mxu0 0
        %1757 = vmatpush1.bf16.msra.mxu0 0
        %1758 = vmatprep.subr.bf16.mxu0 0
        %1759 = vmatpush1.bf16.msra.mxu0 0
        %1760 = vmatprep.mubr.bf16.mxu0 0
        %1761 = vmatmul.mubr.bf16.gmra.mrb[0].mxu0 %v1424
        %v1762 = vpop.f32.mrb[0].mxu0
        %v1763 = vadd.f32 %v1666, %v1762
        %v1764 = vpop.f32.mrb[0].mxu0
        %v1765 = vpop.f32.mrb[0].mxu0
        %v1766 = vadd.f32 %v1669, %v1765
        %v1767 = vpop.f32.mrb[0].mxu0
        %1768 = vmatprep.mubr.bf16.mxu0 0
        %1769 = vmatmul.mubr.bf16.gmra.mrb[0].mxu0 %v1425
        %v1770 = vpop.f32.mrb[0].mxu0
        %v1771 = vadd.f32 %v1674, %v1770
        %v1772 = vpop.f32.mrb[0].mxu0
        %v1773 = vpop.f32.mrb[0].mxu0
        %v1774 = vadd.f32 %v1677, %v1773
        %v1775 = vpop.f32.mrb[0].mxu0
        %1776 = vmatprep.mubr.bf16.mxu0 0
        %1777 = vmatmul.mubr.bf16.gmra.mrb[0].mxu0 %v1426
        %v1778 = vpop.f32.mrb[0].mxu0
        %v1779 = vadd.f32 %v1682, %v1778
        %v1780 = vpop.f32.mrb[0].mxu0
        %v1781 = vpop.f32.mrb[0].mxu0
        %v1782 = vadd.f32 %v1685, %v1781
        %v1783 = vpop.f32.mrb[0].mxu0
        %1784 = vmatprep.mubr.bf16.mxu0 0
        %1785 = vmatmul.mubr.bf16.gmra.mrb[0].mxu0 %v1427
        %v1786 = vpop.f32.mrb[0].mxu0
        %v1787 = vadd.f32 %v1690, %v1786
        %v1788 = vpop.f32.mrb[0].mxu0
        %v1789 = vpop.f32.mrb[0].mxu0
        %v1790 = vadd.f32 %v1693, %v1789
        %v1791 = vpop.f32.mrb[0].mxu0
        %1792 = vmatprep.mubr.bf16.mxu0 0
        %1793 = vmatmul.mubr.bf16.gmra.mrb[0].mxu0 %v1428
        %v1794 = vpop.f32.mrb[0].mxu0
        %v1795 = vadd.f32 %v1698, %v1794
        %v1796 = vpop.f32.mrb[0].mxu0
        %v1797 = vpop.f32.mrb[0].mxu0
        %v1798 = vadd.f32 %v1701, %v1797
        %v1799 = vpop.f32.mrb[0].mxu0
        %1800 = vmatprep.mubr.bf16.mxu0 0
        %1801 = vmatmul.mubr.bf16.gmra.mrb[0].mxu0 %v1429
        %v1802 = vpop.f32.mrb[0].mxu0
        %v1803 = vadd.f32 %v1706, %v1802
        %v1804 = vpop.f32.mrb[0].mxu0
        %v1805 = vpop.f32.mrb[0].mxu0
        %v1806 = vadd.f32 %v1709, %v1805
        %v1807 = vpop.f32.mrb[0].mxu0
        %1808 = vmatprep.mubr.bf16.mxu0 0
        %1809 = vmatmul.mubr.bf16.gmra.mrb[0].mxu0 %v1430
        %v1810 = vpop.f32.mrb[0].mxu0
        %v1811 = vadd.f32 %v1714, %v1810
        %v1812 = vpop.f32.mrb[0].mxu0
        %v1813 = vpop.f32.mrb[0].mxu0
        %v1814 = vadd.f32 %v1717, %v1813
        %v1815 = vpop.f32.mrb[0].mxu0
        %1816 = vmatprep.mubr.bf16.mxu0 0
        %1817 = vmatmul.mubr.bf16.gmra.mrb[0].mxu0 %v1431
        %v1818 = vpop.f32.mrb[0].mxu0
        %v1819 = vadd.f32 %v1722, %v1818
        %v1820 = vpop.f32.mrb[0].mxu0
        %v1821 = vpop.f32.mrb[0].mxu0
        %v1822 = vadd.f32 %v1725, %v1821
        %v1823 = vpop.f32.mrb[0].mxu0
        %1824 = vdwg.mxu0
        %1825 = vmax.xlane.f32.xlu0 %v1763
        %v1826 = vpop.xlane.xlu0 %1825
        %1827 = vmax.xlane.f32.xlu0 %v1766
        %v1828 = vpop.xlane.xlu0 %1827
        %1829 = vmax.xlane.f32.xlu0 %v1771
        %v1830 = vpop.xlane.xlu0 %1829
        %1831 = vmax.xlane.f32.xlu0 %v1774
        %v1832 = vpop.xlane.xlu0 %1831
        %1833 = vmax.xlane.f32.xlu0 %v1779
        %v1834 = vpop.xlane.xlu0 %1833
        %1835 = vmax.xlane.f32.xlu0 %v1782
        %v1836 = vpop.xlane.xlu0 %1835
        %1837 = vmax.xlane.f32.xlu0 %v1787
        %v1838 = vpop.xlane.xlu0 %1837
        %1839 = vmax.xlane.f32.xlu0 %v1790
        %v1840 = vpop.xlane.xlu0 %1839
        %1841 = vmax.xlane.f32.xlu0 %v1795
        %v1842 = vpop.xlane.xlu0 %1841
        %1843 = vmax.xlane.f32.xlu0 %v1798
        %v1844 = vpop.xlane.xlu0 %1843
        %1845 = vmax.xlane.f32.xlu0 %v1803
        %v1846 = vpop.xlane.xlu0 %1845
        %1847 = vmax.xlane.f32.xlu0 %v1806
        %v1848 = vpop.xlane.xlu0 %1847
        %1849 = vmax.xlane.f32.xlu0 %v1811
        %v1850 = vpop.xlane.xlu0 %1849
        %1851 = vmax.xlane.f32.xlu0 %v1814
        %v1852 = vpop.xlane.xlu0 %1851
        %1853 = vmax.xlane.f32.xlu0 %v1819
        %v1854 = vpop.xlane.xlu0 %1853
        %1855 = vmax.xlane.f32.xlu0 %v1822
        %v1856 = vpop.xlane.xlu0 %1855
        %v1857 = vsub.f32 %v1763, %v1826
        %v1858 = vsub.f32 %v1766, %v1828
        %v1859 = vsub.f32 %v1771, %v1830
        %v1860 = vsub.f32 %v1774, %v1832
        %v1861 = vsub.f32 %v1779, %v1834
        %v1862 = vsub.f32 %v1782, %v1836
        %v1863 = vsub.f32 %v1787, %v1838
        %v1864 = vsub.f32 %v1790, %v1840
        %v1865 = vsub.f32 %v1795, %v1842
        %v1866 = vsub.f32 %v1798, %v1844
        %v1867 = vsub.f32 %v1803, %v1846
        %v1868 = vsub.f32 %v1806, %v1848
        %v1869 = vsub.f32 %v1811, %v1850
        %v1870 = vsub.f32 %v1814, %v1852
        %v1871 = vsub.f32 %v1819, %v1854
        %v1872 = vsub.f32 %v1822, %v1856
        %v1873 = vmul.f32 %v1857, 1.442695
        %v1874 = vpow.pop %v1873
        %v1875 = vmul.f32 %v1858, 1.442695
        %v1876 = vpow.pop %v1875
        %v1877 = vmul.f32 %v1859, 1.442695
        %v1878 = vpow.pop %v1877
        %v1879 = vmul.f32 %v1860, 1.442695
        %v1880 = vpow.pop %v1879
        %v1881 = vmul.f32 %v1861, 1.442695
        %v1882 = vpow.pop %v1881
        %v1883 = vmul.f32 %v1862, 1.442695
        %v1884 = vpow.pop %v1883
        %v1885 = vmul.f32 %v1863, 1.442695
        %v1886 = vpow.pop %v1885
        %v1887 = vmul.f32 %v1864, 1.442695
        %v1888 = vpow.pop %v1887
        %v1889 = vmul.f32 %v1865, 1.442695
        %v1890 = vpow.pop %v1889
        %v1891 = vmul.f32 %v1866, 1.442695
        %v1892 = vpow.pop %v1891
        %v1893 = vmul.f32 %v1867, 1.442695
        %v1894 = vpow.pop %v1893
        %v1895 = vmul.f32 %v1868, 1.442695
        %v1896 = vpow.pop %v1895
        %v1897 = vmul.f32 %v1869, 1.442695
        %v1898 = vpow.pop %v1897
        %v1899 = vmul.f32 %v1870, 1.442695
        %v1900 = vpow.pop %v1899
        %v1901 = vmul.f32 %v1871, 1.442695
        %v1902 = vpow.pop %v1901
        %v1903 = vmul.f32 %v1872, 1.442695
        %v1904 = vpow.pop %v1903
        %1905 = vadd.xlane.f32.xlu0 %v1874
        %v1906 = vpop.xlane.xlu0 %1905
        %1907 = vadd.xlane.f32.xlu0 %v1876
        %v1908 = vpop.xlane.xlu0 %1907
        %1909 = vadd.xlane.f32.xlu0 %v1878
        %v1910 = vpop.xlane.xlu0 %1909
        %1911 = vadd.xlane.f32.xlu0 %v1880
        %v1912 = vpop.xlane.xlu0 %1911
        %1913 = vadd.xlane.f32.xlu0 %v1882
        %v1914 = vpop.xlane.xlu0 %1913
        %1915 = vadd.xlane.f32.xlu0 %v1884
        %v1916 = vpop.xlane.xlu0 %1915
        %1917 = vadd.xlane.f32.xlu0 %v1886
        %v1918 = vpop.xlane.xlu0 %1917
        %1919 = vadd.xlane.f32.xlu0 %v1888
        %v1920 = vpop.xlane.xlu0 %1919
        %1921 = vadd.xlane.f32.xlu0 %v1890
        %v1922 = vpop.xlane.xlu0 %1921
        %1923 = vadd.xlane.f32.xlu0 %v1892
        %v1924 = vpop.xlane.xlu0 %1923
        %1925 = vadd.xlane.f32.xlu0 %v1894
        %v1926 = vpop.xlane.xlu0 %1925
        %1927 = vadd.xlane.f32.xlu0 %v1896
        %v1928 = vpop.xlane.xlu0 %1927
        %1929 = vadd.xlane.f32.xlu0 %v1898
        %v1930 = vpop.xlane.xlu0 %1929
        %1931 = vadd.xlane.f32.xlu0 %v1900
        %v1932 = vpop.xlane.xlu0 %1931
        %1933 = vadd.xlane.f32.xlu0 %v1902
        %v1934 = vpop.xlane.xlu0 %1933
        %1935 = vadd.xlane.f32.xlu0 %v1904
        %v1936 = vpop.xlane.xlu0 %1935
        %v1937 = vrcp.pop %v1906
        %v1938 = vrcp.pop %v1908
        %v1939 = vrcp.pop %v1910
        %v1940 = vrcp.pop %v1912
        %v1941 = vrcp.pop %v1914
        %v1942 = vrcp.pop %v1916
        %v1943 = vrcp.pop %v1918
        %v1944 = vrcp.pop %v1920
        %v1945 = vrcp.pop %v1922
        %v1946 = vrcp.pop %v1924
        %v1947 = vrcp.pop %v1926
        %v1948 = vrcp.pop %v1928
        %v1949 = vrcp.pop %v1930
        %v1950 = vrcp.pop %v1932
        %v1951 = vrcp.pop %v1934
        %v1952 = vrcp.pop %v1936
        %v1953 = vmul.f32 %v1874, %v1937
        %v1954 = vmul.f32 %v1876, %v1938
        %v1955 = vmul.f32 %v1878, %v1939
        %v1956 = vmul.f32 %v1880, %v1940
        %v1957 = vmul.f32 %v1882, %v1941
        %v1958 = vmul.f32 %v1884, %v1942
        %v1959 = vmul.f32 %v1886, %v1943
        %v1960 = vmul.f32 %v1888, %v1944
        %v1961 = vmul.f32 %v1890, %v1945
        %v1962 = vmul.f32 %v1892, %v1946
        %v1963 = vmul.f32 %v1894, %v1947
        %v1964 = vmul.f32 %v1896, %v1948
        %v1965 = vmul.f32 %v1898, %v1949
        %v1966 = vmul.f32 %v1900, %v1950
        %v1967 = vmul.f32 %v1902, %v1951
        %v1968 = vmul.f32 %v1904, %v1952
        %v1969 = vlaneseq
        %v1970 = vshrl.u32 %v1969, 7
        %v1971 = vadd.s32 %v1970, 8
        %v1972 = vld [vmem:[%s400] sm:$0xff]
        %v1973 = vcombine.high %v1972, %v1972
        %v1975 = vunpack.c.l.s4 1966171168
        %v1976 = vunpack.c.0.s8 %v1975
        %v1977 = vlaneseq
        %v1978 = vshrl.u32 %v1977, 7
        %v1979 = vsub.s32 %v1976, %v1978
        %v1980 = vrot.slane %v1972, %v1979
        %v1982 = vunpack.c.l.s4 1966171168
        %v1983 = vunpack.c.0.s8 %v1982
        %v1984 = vlaneseq
        %v1985 = vshrl.u32 %v1984, 7
        %v1986 = vsub.s32 %v1983, %v1985
        %v1987 = vrot.slane %v1973, %v1986
        %v1988 = vcombine.high %v1980, %v1980
        %v1989 = vcombine.high %v1987, %v1987
        %v1991 = vunpack.c.l.s4 1966171168
        %v1992 = vunpack.c.0.s8 %v1991
        %v1993 = vlaneseq
        %v1994 = vshrl.u32 %v1993, 7
        %v1995 = vsub.s32 %v1992, %v1994
        %v1996 = vrot.slane %v1980, %v1995
        %v1998 = vunpack.c.l.s4 1966171168
        %v1999 = vunpack.c.0.s8 %v1998
        %v2000 = vlaneseq
        %v2001 = vshrl.u32 %v2000, 7
        %v2002 = vsub.s32 %v1999, %v2001
        %v2003 = vrot.slane %v1987, %v2002
        %v2005 = vunpack.c.l.s4 1966171168
        %v2006 = vunpack.c.0.s8 %v2005
        %v2007 = vlaneseq
        %v2008 = vshrl.u32 %v2007, 7
        %v2009 = vsub.s32 %v2006, %v2008
        %v2010 = vrot.slane %v1988, %v2009
        %v2012 = vunpack.c.l.s4 1966171168
        %v2013 = vunpack.c.0.s8 %v2012
        %v2014 = vlaneseq
        %v2015 = vshrl.u32 %v2014, 7
        %v2016 = vsub.s32 %v2013, %v2015
        %v2017 = vrot.slane %v1989, %v2016
        %v2018 = vcombine.high %v1996, %v1996
        %v2019 = vcombine.high %v2003, %v2003
        %v2020 = vcombine.high %v2010, %v2010
        %v2021 = vcombine.high %v2017, %v2017
        %v2022 = vlaneseq
        %v2023 = vshrl.u32 %v2022, 7
        %v2024 = vsub.s32 0, %v2023
        %v2025 = vrot.slane %v1996, %v2024
        %v2026 = vlaneseq
        %v2027 = vshrl.u32 %v2026, 7
        %v2028 = vsub.s32 0, %v2027
        %v2029 = vrot.slane %v2010, %v2028
        %v2030 = vlaneseq
        %v2031 = vshrl.u32 %v2030, 7
        %v2032 = vsub.s32 0, %v2031
        %v2033 = vrot.slane %v2018, %v2032
        %v2034 = vlaneseq
        %v2035 = vshrl.u32 %v2034, 7
        %v2036 = vsub.s32 0, %v2035
        %v2037 = vrot.slane %v2020, %v2036
        %v2038 = vlaneseq
        %v2039 = vshrl.u32 %v2038, 7
        %v2040 = vsub.s32 0, %v2039
        %v2041 = vrot.slane %v2003, %v2040
        %v2042 = vlaneseq
        %v2043 = vshrl.u32 %v2042, 7
        %v2044 = vsub.s32 0, %v2043
        %v2045 = vrot.slane %v2017, %v2044
        %v2046 = vlaneseq
        %v2047 = vshrl.u32 %v2046, 7
        %v2048 = vsub.s32 0, %v2047
        %v2049 = vrot.slane %v2019, %v2048
        %v2050 = vlaneseq
        %v2051 = vshrl.u32 %v2050, 7
        %v2052 = vsub.s32 0, %v2051
        %v2053 = vrot.slane %v2021, %v2052
        %2054 = vset.pattern.permute.xlu0 0
        %2055 = vperm.xlu0 %2054, %v2025
        %v2056 = vpop.permute.xlu0 %2055
        %2057 = vset.pattern.permute.xlu0 0
        %2058 = vperm.xlu0 %2057, %v2029
        %v2059 = vpop.permute.xlu0 %2058
        %2060 = vset.pattern.permute.xlu0 0
        %2061 = vperm.xlu0 %2060, %v2033
        %v2062 = vpop.permute.xlu0 %2061
        %2063 = vset.pattern.permute.xlu0 0
        %2064 = vperm.xlu0 %2063, %v2037
        %v2065 = vpop.permute.xlu0 %2064
        %2066 = vset.pattern.permute.xlu0 0
        %2067 = vperm.xlu0 %2066, %v2041
        %v2068 = vpop.permute.xlu0 %2067
        %2069 = vset.pattern.permute.xlu0 0
        %2070 = vperm.xlu0 %2069, %v2045
        %v2071 = vpop.permute.xlu0 %2070
        %2072 = vset.pattern.permute.xlu0 0
        %2073 = vperm.xlu0 %2072, %v2049
        %v2074 = vpop.permute.xlu0 %2073
        %2075 = vset.pattern.permute.xlu0 0
        %2076 = vperm.xlu0 %2075, %v2053
        %v2077 = vpop.permute.xlu0 %2076
        %vm2078 = vcmp.lt.s32.totalorder %v1970, %v2056
        %vm2079 = vcmp.lt.s32.totalorder %v1971, %v2056
        %vm2080 = vcmp.lt.s32.totalorder %v1970, %v2059
        %vm2081 = vcmp.lt.s32.totalorder %v1971, %v2059
        %vm2082 = vcmp.lt.s32.totalorder %v1970, %v2062
        %vm2083 = vcmp.lt.s32.totalorder %v1971, %v2062
        %vm2084 = vcmp.lt.s32.totalorder %v1970, %v2065
        %vm2085 = vcmp.lt.s32.totalorder %v1971, %v2065
        %vm2086 = vcmp.lt.s32.totalorder %v1970, %v2068
        %vm2087 = vcmp.lt.s32.totalorder %v1971, %v2068
        %vm2088 = vcmp.lt.s32.totalorder %v1970, %v2071
        %vm2089 = vcmp.lt.s32.totalorder %v1971, %v2071
        %vm2090 = vcmp.lt.s32.totalorder %v1970, %v2074
        %vm2091 = vcmp.lt.s32.totalorder %v1971, %v2074
        %vm2092 = vcmp.lt.s32.totalorder %v1970, %v2077
        %vm2093 = vcmp.lt.s32.totalorder %v1971, %v2077
        %v2094 = vsel %vm2078, %v1953, 0.0
        %v2095 = vsel %vm2079, %v1954, 0.0
        %v2096 = vsel %vm2080, %v1955, 0.0
        %v2097 = vsel %vm2081, %v1956, 0.0
        %v2098 = vsel %vm2082, %v1957, 0.0
        %v2099 = vsel %vm2083, %v1958, 0.0
        %v2100 = vsel %vm2084, %v1959, 0.0
        %v2101 = vsel %vm2085, %v1960, 0.0
        %v2102 = vsel %vm2086, %v1961, 0.0
        %v2103 = vsel %vm2087, %v1962, 0.0
        %v2104 = vsel %vm2088, %v1963, 0.0
        %v2105 = vsel %vm2089, %v1964, 0.0
        %v2106 = vsel %vm2090, %v1965, 0.0
        %v2107 = vsel %vm2091, %v1966, 0.0
        %v2108 = vsel %vm2092, %v1967, 0.0
        %v2109 = vsel %vm2093, %v1968, 0.0
        %2110 = vst [vmem:[%s395] sm:$0xff] %v2094
        %2111 = vst [vmem:[%s395 + $0x8] sm:$0xff] %v2095
        %2112 = vst [vmem:[%s395 + $0x10] sm:$0xff] %v2096
        %2113 = vst [vmem:[%s395 + $0x18] sm:$0xff] %v2097
        %2114 = vst [vmem:[%s395 + $0x20] sm:$0xff] %v2098
        %2115 = vst [vmem:[%s395 + $0x28] sm:$0xff] %v2099
        %2116 = vst [vmem:[%s395 + $0x30] sm:$0xff] %v2100
        %2117 = vst [vmem:[%s395 + $0x38] sm:$0xff] %v2101
        %2118 = vst [vmem:[%s395 + $0x40] sm:$0xff] %v2102
        %2119 = vst [vmem:[%s395 + $0x48] sm:$0xff] %v2103
        %2120 = vst [vmem:[%s395 + $0x50] sm:$0xff] %v2104
        %2121 = vst [vmem:[%s395 + $0x58] sm:$0xff] %v2105
        %2122 = vst [vmem:[%s395 + $0x60] sm:$0xff] %v2106
        %2123 = vst [vmem:[%s395 + $0x68] sm:$0xff] %v2107
        %2124 = vst [vmem:[%s395 + $0x70] sm:$0xff] %v2108
        %2125 = vst [vmem:[%s395 + $0x78] sm:$0xff] %v2109
        %s2126 = sand.u32 %s213, 1
        %s2127 = scalar_lea.sflag [#allocation4], %s2126
        %s2128 = sand.u32 %s213, 1
        %s2129 = smul.addr %s2128, 128
        %s2130 = scalar_lea.vmem [#allocation11], %s2129
        // Predicated region
        $region73: #{tpu_custom_call.1} parent=51 // pred_check
          %p2131 = pneg %p223
        $region74: #{tpu_custom_call.1} parent=51 // pred_check_branch
          %2133 = sbr.rel (%p2131) target = $region76
        $region75: #{tpu_custom_call.1} parent=51 // pred_region
          %s2134 = smul.u32 8, %s27
          %s2136 = ssub.s32 2048, 2048
          %2137 = vsyncadd %s2127, %s2136
          %s2138 = smul.addr %s2134, 2
          %s2139 = smul.addr %s2138, 128
          %s2140 = scalar_lea.hbm %s8, %s2139
          %s2141 = sshll.u32 %s2130, 4
          %s2142 = int_to_ptr.vmem [resolvable:$true] %s2141
          %2147 = dma.vmem_to_hbm [thread:$0]  %s2142, 2048, %s2140, %s2127, 128, 128, 8
        $region76: #{tpu_custom_call.1} parent=51 // pred_fallthru
          _
      $region52: #{tpu_custom_call.1} parent=5 // pred_fallthru
        _
      %p2148 = scmp.le.s32.totalorder 2, %s22
      // Predicated region
      $region77: #{tpu_custom_call.1} parent=5 // pred_check
        %p2149 = pneg %p2148
      $region78: #{tpu_custom_call.1} parent=5 // pred_check_branch
        %2151 = sbr.rel (%p2149) target = $region80
      $region79: #{tpu_custom_call.1} parent=5 // pred_region
        %s2152 = ssub.s32 %s22, 2
        // Predicated region
        $region81: #{tpu_custom_call.1} parent=79 // pred_check
          %p2153 = pneg %p229
        $region82: #{tpu_custom_call.1} parent=79 // pred_check_branch
          %2155 = sbr.rel (%p2153) target = $region84
        $region83: #{tpu_custom_call.1} parent=79 // pred_region
          %s2156 = sand.u32 %s214, 1
          %s2157 = scalar_lea.sflag [#allocation4], %s2156
          %s2158 = sand.u32 %s214, 1
          %s2159 = smul.addr %s2158, 128
          %s2160 = scalar_lea.vmem [#allocation11], %s2159
          %2161 = dma.done %s2157, 2048
        $region84: #{tpu_custom_call.1} parent=79 // pred_fallthru
          _
      $region80: #{tpu_custom_call.1} parent=5 // pred_fallthru
        _
    $region6: #{tpu_custom_call.1} parent=1 // loop_footer
      %s26 = sadd.s32 1, %s22
    $region7: #{tpu_custom_call.1} parent=1 // loop_footer_branch
      %21 = sbr.rel target = $region3
    $region8: #{tpu_custom_call.1} parent=1 // loop_exit
      _
    %2162 = vsyncpa [#allocation3], 1
    %s2163 = scalar_lea.sflag [#allocation3], 1
    %2164 = vsyncpa %s2163, 1
    %2165 = vsyncpa [#allocation6], 1
    %2166 = vsyncpa [#allocation9], 1
    %2167 = vsyncpa [#allocation4], 1
    %s2168 = scalar_lea.sflag [#allocation4], 1
    %2169 = vsyncpa %s2168, 1

</llo_original>
